<compile_context>
chip_gen: v5e
topology: v5e:2x2
jax: 0.10.0
libtpu: 0.0.40
codegen_flags: <defaults>
</compile_context>

<pallas_src>
import functools

import jax
import jax.numpy as jnp
import numpy as np
from jax.experimental import pallas as pl
from jax.experimental.pallas import tpu as pltpu

# ----------------------------- tiny LLaMA config -----------------------------
VOCAB = 256
HIDDEN = 64
N_LAYERS = 2
N_HEADS = 4
HEAD_DIM = HIDDEN // N_HEADS
INTERMEDIATE = 128
ROPE_THETA = 10000.0
RMS_EPS = 1e-5
LORA_R = 4
LORA_ALPHA = 8

_NEG = -1e30  # additive mask value (f32-safe; not -inf to avoid inf-inf NaNs)


# ------------------------------ Pallas kernels -------------------------------
def _rmsnorm_f32(x, w):
    var = jnp.mean(x * x, axis=-1, keepdims=True)
    return x * jax.lax.rsqrt(var + RMS_EPS) * w


def _attn_block_kernel(x_ref, mask_ref, nw_ref, wqkvr_ref, wo_ref, cos_ref, sin_ref,
                       o_ref, *, n_heads, head_dim):
    """One decoder self-attention block for one batch element (grid over B)."""
    x = x_ref[0].astype(jnp.float32)                          # (S, H) residual stream
    S, H = x.shape

    # --- RMSNorm (f32 math) ---
    normed = _rmsnorm_f32(x, nw_ref[...].astype(jnp.float32))

    # --- fused QKV + RoPE-partner matmul: (S,H) @ (H,5H), bf16 in / f32 acc ---
    qkvr = jnp.dot(normed.astype(jnp.bfloat16), wqkvr_ref[...],
                   preferred_element_type=jnp.float32)        # (S, 5H)
    cos = cos_ref[...]                                        # (S, H) f32
    sin = sin_ref[...]
    # RoPE is purely elementwise: rotate_half was folded into the weight (W @ P).
    q = qkvr[:, 0 * H:1 * H] * cos + qkvr[:, 3 * H:4 * H] * sin
    k = qkvr[:, 1 * H:2 * H] * cos + qkvr[:, 4 * H:5 * H] * sin
    v = qkvr[:, 2 * H:3 * H]

    # --- causal + key-padding mask built in-kernel (no (B*H,S,S) bias from HBM) ---
    row = jax.lax.broadcasted_iota(jnp.int32, (S, S), 0)
    col = jax.lax.broadcasted_iota(jnp.int32, (S, S), 1)
    keep = (col <= row) & (mask_ref[0] > 0.0)                 # (S,S) & (1,S) -> (S,S)

    scale = 1.0 / float(head_dim) ** 0.5
    head_outs = []
    for h in range(n_heads):                                  # static unrolled loop
        sl = slice(h * head_dim, (h + 1) * head_dim)
        qh = q[:, sl].astype(jnp.bfloat16)
        kh = k[:, sl].astype(jnp.bfloat16)
        vh = v[:, sl].astype(jnp.bfloat16)
        s = jax.lax.dot_general(qh, kh, (((1,), (1,)), ((), ())),
                                preferred_element_type=jnp.float32) * scale
        s = jnp.where(keep, s, _NEG)
        m = jnp.max(s, axis=-1, keepdims=True)
        p = jnp.exp(s - m)
        p = jnp.where(keep, p, 0.0)                           # zero fully-masked rows
        l = jnp.sum(p, axis=-1, keepdims=True)
        l_inv = pl.reciprocal(jnp.where(l > 0.0, l, 1.0), approx=True)
        head_outs.append(
            jnp.dot(p.astype(jnp.bfloat16), vh,
                    preferred_element_type=jnp.float32) * l_inv)
    attn = jnp.concatenate(head_outs, axis=-1)                # (S, H)

    # --- o-proj + residual add (fused epilogue) ---
    out = jnp.dot(attn.astype(jnp.bfloat16), wo_ref[...],
                  preferred_element_type=jnp.float32)
    o_ref[0] = (x + out).astype(o_ref.dtype)


def _mlp_block_kernel(x_ref, nw_ref, wgu_ref, wd_ref, o_ref, *, intermediate):
    """One decoder MLP (SwiGLU) block for one batch element (grid over B)."""
    x = x_ref[0].astype(jnp.float32)                          # (S, H)
    normed = _rmsnorm_f32(x, nw_ref[...].astype(jnp.float32))
    gu = jnp.dot(normed.astype(jnp.bfloat16), wgu_ref[...],
                 preferred_element_type=jnp.float32)          # (S, 2I) lane-dense
    g = gu[:, :intermediate]
    u = gu[:, intermediate:]
    act = g * jax.nn.sigmoid(g) * u                           # SwiGLU in f32
    out = jnp.dot(act.astype(jnp.bfloat16), wd_ref[...],
                  preferred_element_type=jnp.float32)
    o_ref[0] = (x + out).astype(o_ref.dtype)


def _head_kernel(x_ref, nw_ref, wl_ref, normed_ref, logits_ref):
    """Final RMSNorm + lm_head for one batch element (grid over B)."""
    x = x_ref[0].astype(jnp.float32)                          # (S, H)
    normed = _rmsnorm_f32(x, nw_ref[...].astype(jnp.float32))
    normed_ref[0] = normed.astype(normed_ref.dtype)
    logits_ref[0] = jnp.dot(normed.astype(jnp.bfloat16), wl_ref[...],
                            preferred_element_type=jnp.float32).astype(logits_ref.dtype)


# ------------------------------ kernel wrappers -------------------------------
def attn_block(hidden, mask_b1s, norm_w, w_qkvr, w_o, cos_full, sin_full):
    B, S, H = hidden.shape
    kern = functools.partial(_attn_block_kernel, n_heads=N_HEADS, head_dim=HEAD_DIM)
    return pl.pallas_call(
        kern,
        out_shape=jax.ShapeDtypeStruct((B, S, H), jnp.float32),
        grid=(B,),
        in_specs=[
            pl.BlockSpec((1, S, H), lambda b: (b, 0, 0)),      # hidden (residual)
            pl.BlockSpec((1, 1, S), lambda b: (b, 0, 0)),      # attention_mask row
            pl.BlockSpec((1, H), lambda b: (0, 0)),            # input_norm weight
            pl.BlockSpec((H, 5 * H), lambda b: (0, 0)),        # [Wq|Wk|Wv|WqP|WkP]
            pl.BlockSpec((H, H), lambda b: (0, 0)),            # o-proj weight
            pl.BlockSpec((S, H), lambda b: (0, 0)),            # RoPE cos (tiled to H)
            pl.BlockSpec((S, H), lambda b: (0, 0)),            # RoPE sin
        ],
        out_specs=pl.BlockSpec((1, S, H), lambda b: (b, 0, 0)),
        compiler_params=pltpu.CompilerParams(dimension_semantics=("parallel",)),
    )(hidden, mask_b1s, norm_w, w_qkvr, w_o, cos_full, sin_full)


def mlp_block(hidden, norm_w, w_gateup, w_down):
    B, S, H = hidden.shape
    kern = functools.partial(_mlp_block_kernel, intermediate=INTERMEDIATE)
    return pl.pallas_call(
        kern,
        out_shape=jax.ShapeDtypeStruct((B, S, H), jnp.float32),
        grid=(B,),
        in_specs=[
            pl.BlockSpec((1, S, H), lambda b: (b, 0, 0)),
            pl.BlockSpec((1, H), lambda b: (0, 0)),
            pl.BlockSpec((H, 2 * INTERMEDIATE), lambda b: (0, 0)),   # [gate|up]
            pl.BlockSpec((INTERMEDIATE, H), lambda b: (0, 0)),
        ],
        out_specs=pl.BlockSpec((1, S, H), lambda b: (b, 0, 0)),
        compiler_params=pltpu.CompilerParams(dimension_semantics=("parallel",)),
    )(hidden, norm_w, w_gateup, w_down)


def lm_head_block(hidden, norm_w, w_lm):
    B, S, H = hidden.shape
    V = w_lm.shape[1]
    return pl.pallas_call(
        _head_kernel,
        out_shape=(jax.ShapeDtypeStruct((B, S, H), jnp.float32),
                   jax.ShapeDtypeStruct((B, S, V), jnp.float32)),
        grid=(B,),
        in_specs=[
            pl.BlockSpec((1, S, H), lambda b: (b, 0, 0)),
            pl.BlockSpec((1, H), lambda b: (0, 0)),
            pl.BlockSpec((H, V), lambda b: (0, 0)),
        ],
        out_specs=(
            pl.BlockSpec((1, S, H), lambda b: (b, 0, 0)),
            pl.BlockSpec((1, S, V), lambda b: (b, 0, 0)),
        ),
        compiler_params=pltpu.CompilerParams(dimension_semantics=("parallel",)),
    )(hidden, norm_w, w_lm)


# ------------------------------ plain-JAX glue --------------------------------
def rope_cos_sin_full(seq_len, head_dim, n_heads):
    inv_freq = 1.0 / (ROPE_THETA ** (jnp.arange(0, head_dim, 2, dtype=jnp.float32)
                                     / head_dim))
    pos = jnp.arange(seq_len, dtype=jnp.float32)
    freqs = pos[:, None] * inv_freq[None, :]                  # (S, Dh/2)
    emb = jnp.concatenate([freqs, freqs], axis=-1)            # (S, Dh)  (HF convention)
    cos = jnp.tile(jnp.cos(emb), (1, n_heads))                # (S, H)
    sin = jnp.tile(jnp.sin(emb), (1, n_heads))
    return cos, sin


def _rope_rotation_matrix(hidden, head_dim):
    """P such that (x @ P) == per-head rotate_half(x) for x of shape (..., hidden)."""
    half = head_dim // 2
    idx = np.arange(hidden)
    local = idx % head_dim
    partner = np.where(local < half, idx + half, idx - half)
    sign = np.where(local < half, -1.0, 1.0).astype(np.float32)
    P = np.zeros((hidden, hidden), dtype=np.float32)
    P[partner, idx] = sign
    return jnp.asarray(P)


def causal_lm_loss(logits, labels):
    # HF-style shifted cross entropy with ignore_index = -100.
    shift_logits = logits[:, :-1, :].astype(jnp.float32)
    shift_labels = labels[:, 1:]
    logp = jax.nn.log_softmax(shift_logits, axis=-1)
    valid = (shift_labels != -100)
    safe = jnp.where(valid, shift_labels, 0)
    nll = -jnp.take_along_axis(logp, safe[..., None], axis=-1)[..., 0]
    denom = jnp.maximum(jnp.sum(valid.astype(jnp.float32)), 1.0)
    return jnp.sum(nll * valid.astype(jnp.float32)) / denom


# ------------------------------ parameter init --------------------------------
def init_raw_params(key):
    """Raw HF/PEFT-style weights (q/k/v/o, gate/up/down, LoRA A/B on q_proj,v_proj)."""
    def normal(k, shape, scale=0.02):
        return scale * jax.random.normal(k, shape, dtype=jnp.float32)

    keys = jax.random.split(key, 4 + N_LAYERS)
    params = {
        "embed": normal(keys[0], (VOCAB, HIDDEN)),
        "final_norm": jnp.ones((HIDDEN,), jnp.float32),
        "lm_head": normal(keys[1], (HIDDEN, VOCAB)),
        "layers": [],
    }
    for li in range(N_LAYERS):
        lk = jax.random.split(keys[4 + li], 10)
        params["layers"].append({
            "input_norm": jnp.ones((HIDDEN,), jnp.float32),
            "post_norm": jnp.ones((HIDDEN,), jnp.float32),
            "q": normal(lk[0], (HIDDEN, HIDDEN)),
            "k": normal(lk[1], (HIDDEN, HIDDEN)),
            "v": normal(lk[2], (HIDDEN, HIDDEN)),
            "o": normal(lk[3], (HIDDEN, HIDDEN)),
            "gate": normal(lk[4], (HIDDEN, INTERMEDIATE)),
            "up": normal(lk[5], (HIDDEN, INTERMEDIATE)),
            "down": normal(lk[6], (INTERMEDIATE, HIDDEN)),
            # LoRA on q_proj / v_proj (PEFT default init: A ~ N, B = 0).
            "q_lora_A": normal(lk[7], (HIDDEN, LORA_R)),
            "q_lora_B": jnp.zeros((LORA_R, HIDDEN), jnp.float32),
            "v_lora_A": normal(lk[8], (HIDDEN, LORA_R)),
            "v_lora_B": jnp.zeros((LORA_R, HIDDEN), jnp.float32),
        })
    return params


def prepare_inference_params(raw):
    """Merge LoRA, fuse QKV (+RoPE-partner) / gate-up, cast matmul weights to bf16."""
    P = _rope_rotation_matrix(HIDDEN, HEAD_DIM)
    lora_scale = LORA_ALPHA / LORA_R
    layers = []
    for lyr in raw["layers"]:
        wq = lyr["q"] + lora_scale * (lyr["q_lora_A"] @ lyr["q_lora_B"])
        wv = lyr["v"] + lora_scale * (lyr["v_lora_A"] @ lyr["v_lora_B"])
        wk = lyr["k"]
        w_qkvr = jnp.concatenate([wq, wk, wv, wq @ P, wk @ P], axis=1)   # (H, 5H)
        layers.append({
            "input_norm": lyr["input_norm"].reshape(1, HIDDEN),
            "post_norm": lyr["post_norm"].reshape(1, HIDDEN),
            "w_qkvr": w_qkvr.astype(jnp.bfloat16),
            "w_o": lyr["o"].astype(jnp.bfloat16),
            "w_gateup": jnp.concatenate([lyr["gate"], lyr["up"]],
                                        axis=1).astype(jnp.bfloat16),    # (H, 2I)
            "w_down": lyr["down"].astype(jnp.bfloat16),
        })
    return {
        "embed": raw["embed"],
        "final_norm": raw["final_norm"].reshape(1, HIDDEN),
        "lm_head": raw["lm_head"].astype(jnp.bfloat16),
        "layers": layers,
    }


# ------------------------------ model forward ---------------------------------
def llama_forward(params, inputs, attention_mask, labels=None):
    # Mirrors LLaMANet.forward dispatch: int 2-D -> input_ids, else inputs_embeds.
    if inputs.ndim == 2 and inputs.dtype in (jnp.int32, jnp.int64):
        hidden = jnp.take(params["embed"], inputs, axis=0)               # (B, S, H)
    else:
        hidden = inputs.astype(jnp.float32)                              # (B, S, H)

    B, S, H = hidden.shape
    cos_full, sin_full = rope_cos_sin_full(S, HEAD_DIM, N_HEADS)
    mask_b1s = attention_mask.astype(jnp.float32).reshape(B, 1, S)

    all_hidden = [hidden]
    for layer in params["layers"]:
        hidden = attn_block(hidden, mask_b1s, layer["input_norm"],
                            layer["w_qkvr"], layer["w_o"], cos_full, sin_full)
        hidden = mlp_block(hidden, layer["post_norm"],
                           layer["w_gateup"], layer["w_down"])
        all_hidden.append(hidden)

    # Final norm + lm_head fused; HF's hidden_states tuple ends with the normed state.
    final, logits = lm_head_block(hidden, params["final_norm"], params["lm_head"])
    all_hidden[-1] = final

    loss = causal_lm_loss(logits, labels) if labels is not None else None
    return {
        "logits": logits,
        "loss": loss,
        "hidden_states": tuple(all_hidden),   # output_hidden_states=True
    }


# ------------------------------------ main -------------------------------------
if __name__ == "__main__":
    key = jax.random.PRNGKey(0)
    pkey, ikey, lkey = jax.random.split(key, 3)

    params = prepare_inference_params(init_raw_params(pkey))

    B, S = 2, 8
    input_ids = jax.random.randint(ikey, (B, S), 0, VOCAB, dtype=jnp.int32)
    # left padding (pad_token_id=0, padding_side='left'): first token of row 0 padded.
    attention_mask = jnp.ones((B, S), dtype=jnp.int32).at[0, 0].set(0)
    labels = jax.random.randint(lkey, (B, S), 0, VOCAB, dtype=jnp.int32)
    labels = labels.at[0, 0].set(-100)  # ignore the padded position

    fwd = jax.jit(llama_forward)
    out = fwd(params, input_ids, attention_mask, labels)
    jax.block_until_ready(out["logits"])
    jax.block_until_ready(out["loss"])
    jax.block_until_ready(out["hidden_states"])

    assert out["logits"].shape == (B, S, VOCAB)
    assert len(out["hidden_states"]) == N_LAYERS + 1
    assert jnp.isfinite(out["loss"])
    print("KERNEL_OK")
</pallas_src>

<mosaic_0001>
module attributes {stable_mosaic.version = 11 : i64} {
  func.func @_attn_block_kernel(%arg0: i32, %arg1: memref<1x8x64xf32, #tpu.memory_space<vmem>>, %arg2: memref<1x1x8xf32, #tpu.memory_space<vmem>>, %arg3: memref<1x64xf32, #tpu.memory_space<vmem>>, %arg4: memref<64x320xbf16, #tpu.memory_space<vmem>>, %arg5: memref<64x64xbf16, #tpu.memory_space<vmem>>, %arg6: memref<8x64xf32, #tpu.memory_space<vmem>>, %arg7: memref<8x64xf32, #tpu.memory_space<vmem>>, %arg8: memref<1x8x64xf32, #tpu.memory_space<vmem>>) attributes {dimension_semantics = [#tpu.dimension_semantics<parallel>], iteration_bounds = array<i64: 2>, scalar_prefetch = 0 : i64, scratch_operands = 0 : i64, tpu.core_type = #tpu.core_type<tc>, window_params = [{transform_indices = @transform_0, window_bounds = array<i64: 1, 8, 64>}, {transform_indices = @transform_1, window_bounds = array<i64: 1, 1, 8>}, {pipeline_mode = #tpu.pipeline_mode<synchronous>, transform_indices = @transform_2, window_bounds = array<i64: 1, 64>}, {pipeline_mode = #tpu.pipeline_mode<synchronous>, transform_indices = @transform_3, window_bounds = array<i64: 64, 320>}, {pipeline_mode = #tpu.pipeline_mode<synchronous>, transform_indices = @transform_4, window_bounds = array<i64: 64, 64>}, {pipeline_mode = #tpu.pipeline_mode<synchronous>, transform_indices = @transform_5, window_bounds = array<i64: 8, 64>}, {pipeline_mode = #tpu.pipeline_mode<synchronous>, transform_indices = @transform_6, window_bounds = array<i64: 8, 64>}, {transform_indices = @transform_7, window_bounds = array<i64: 1, 8, 64>}]} {
    %c0 = arith.constant 0 : index
    %c0_0 = arith.constant 0 : index
    %c0_1 = arith.constant 0 : index
    %0 = vector.load %arg1[%c0, %c0_0, %c0_1] : memref<1x8x64xf32, #tpu.memory_space<vmem>>, vector<1x8x64xf32>
    %1 = vector.shape_cast %0 : vector<1x8x64xf32> to vector<8x64xf32>
    %c0_2 = arith.constant 0 : index
    %c0_3 = arith.constant 0 : index
    %2 = vector.load %arg3[%c0_2, %c0_3] : memref<1x64xf32, #tpu.memory_space<vmem>>, vector<1x64xf32>
    %3 = arith.mulf %1, %1 : vector<8x64xf32>
    %cst = arith.constant dense<0.000000e+00> : vector<8xf32>
    %4 = vector.multi_reduction <add>, %3, %cst [1] : vector<8x64xf32> to vector<8xf32>
    %5 = vector.shape_cast %4 : vector<8xf32> to vector<8x1xf32>
    %cst_4 = arith.constant 6.400000e+01 : f32
    %6 = vector.broadcast %cst_4 : f32 to vector<8x1xf32>
    %7 = arith.divf %5, %6 : vector<8x1xf32>
    %cst_5 = arith.constant 9.99999974E-6 : f32
    %8 = vector.broadcast %cst_5 : f32 to vector<8x1xf32>
    %9 = arith.addf %7, %8 : vector<8x1xf32>
    %10 = math.rsqrt %9 : vector<8x1xf32>
    %11 = vector.broadcast %10 : vector<8x1xf32> to vector<8x64xf32>
    %12 = arith.mulf %1, %11 : vector<8x64xf32>
    %13 = vector.broadcast %2 : vector<1x64xf32> to vector<8x64xf32>
    %14 = arith.mulf %12, %13 : vector<8x64xf32>
    %15 = arith.truncf %14 : vector<8x64xf32> to vector<8x64xbf16>
    %c0_6 = arith.constant 0 : index
    %c0_7 = arith.constant 0 : index
    %16 = vector.load %arg4[%c0_6, %c0_7] : memref<64x320xbf16, #tpu.memory_space<vmem>>, vector<64x320xbf16>
    %cst_8 = arith.constant dense<0.000000e+00> : vector<8x320xf32>
    %17 = tpu.matmul %15, %16, %cst_8 {dimension_numbers = #tpu.dot_dimension_numbers<[1], [0], [0], [1], [0, 0, 1, 1], [], []>} : vector<8x64xbf16>, vector<64x320xbf16>, vector<8x320xf32> -> vector<8x320xf32>
    %c0_9 = arith.constant 0 : index
    %c0_10 = arith.constant 0 : index
    %18 = vector.load %arg6[%c0_9, %c0_10] : memref<8x64xf32, #tpu.memory_space<vmem>>, vector<8x64xf32>
    %c0_11 = arith.constant 0 : index
    %c0_12 = arith.constant 0 : index
    %19 = vector.load %arg7[%c0_11, %c0_12] : memref<8x64xf32, #tpu.memory_space<vmem>>, vector<8x64xf32>
    %20 = vector.extract_strided_slice %17 {offsets = [0, 0], sizes = [8, 64], strides = [1, 1]} : vector<8x320xf32> to vector<8x64xf32>
    %21 = arith.mulf %20, %18 : vector<8x64xf32>
    %22 = vector.extract_strided_slice %17 {offsets = [0, 192], sizes = [8, 64], strides = [1, 1]} : vector<8x320xf32> to vector<8x64xf32>
    %23 = arith.mulf %22, %19 : vector<8x64xf32>
    %24 = arith.addf %21, %23 : vector<8x64xf32>
    %25 = vector.extract_strided_slice %17 {offsets = [0, 64], sizes = [8, 64], strides = [1, 1]} : vector<8x320xf32> to vector<8x64xf32>
    %26 = arith.mulf %25, %18 : vector<8x64xf32>
    %27 = vector.extract_strided_slice %17 {offsets = [0, 256], sizes = [8, 64], strides = [1, 1]} : vector<8x320xf32> to vector<8x64xf32>
    %28 = arith.mulf %27, %19 : vector<8x64xf32>
    %29 = arith.addf %26, %28 : vector<8x64xf32>
    %30 = vector.extract_strided_slice %17 {offsets = [0, 128], sizes = [8, 64], strides = [1, 1]} : vector<8x320xf32> to vector<8x64xf32>
    %31 = tpu.iota {dimensions = array<i32: 0>} : vector<8x8xi32>
    %32 = tpu.iota {dimensions = array<i32: 1>} : vector<8x8xi32>
    %33 = arith.cmpi sle, %32, %31 : vector<8x8xi32>
    %c0_13 = arith.constant 0 : index
    %c0_14 = arith.constant 0 : index
    %c0_15 = arith.constant 0 : index
    %34 = vector.load %arg2[%c0_13, %c0_14, %c0_15] : memref<1x1x8xf32, #tpu.memory_space<vmem>>, vector<1x1x8xf32>
    %35 = vector.shape_cast %34 : vector<1x1x8xf32> to vector<1x8xf32>
    %cst_16 = arith.constant 0.000000e+00 : f32
    %36 = vector.broadcast %cst_16 : f32 to vector<1x8xf32>
    %37 = arith.cmpf ogt, %35, %36 : vector<1x8xf32>
    %38 = vector.broadcast %37 : vector<1x8xi1> to vector<8x8xi1>
    %39 = arith.andi %33, %38 : vector<8x8xi1>
    %40 = vector.extract_strided_slice %24 {offsets = [0, 0], sizes = [8, 16], strides = [1, 1]} : vector<8x64xf32> to vector<8x16xf32>
    %41 = arith.truncf %40 : vector<8x16xf32> to vector<8x16xbf16>
    %42 = vector.extract_strided_slice %29 {offsets = [0, 0], sizes = [8, 16], strides = [1, 1]} : vector<8x64xf32> to vector<8x16xf32>
    %43 = arith.truncf %42 : vector<8x16xf32> to vector<8x16xbf16>
    %44 = vector.extract_strided_slice %30 {offsets = [0, 0], sizes = [8, 16], strides = [1, 1]} : vector<8x64xf32> to vector<8x16xf32>
    %45 = arith.truncf %44 : vector<8x16xf32> to vector<8x16xbf16>
    %cst_17 = arith.constant dense<0.000000e+00> : vector<8x8xf32>
    %46 = tpu.matmul %41, %43, %cst_17 {dimension_numbers = #tpu.dot_dimension_numbers<[1], [1], [0], [0], [0, 0, 1, 0], [], []>} : vector<8x16xbf16>, vector<8x16xbf16>, vector<8x8xf32> -> vector<8x8xf32>
    %cst_18 = arith.constant 2.500000e-01 : f32
    %47 = vector.broadcast %cst_18 : f32 to vector<8x8xf32>
    %48 = arith.mulf %46, %47 : vector<8x8xf32>
    %cst_19 = arith.constant -1.000000e+30 : f32
    %49 = vector.broadcast %cst_19 : f32 to vector<8x8xf32>
    %50 = arith.select %39, %48, %49 : vector<8x8xi1>, vector<8x8xf32>
    %cst_20 = arith.constant dense<0xFF800000> : vector<8xf32>
    %51 = vector.multi_reduction <maximumf>, %50, %cst_20 [1] : vector<8x8xf32> to vector<8xf32>
    %52 = vector.shape_cast %51 : vector<8xf32> to vector<8x1xf32>
    %53 = vector.broadcast %52 : vector<8x1xf32> to vector<8x8xf32>
    %54 = arith.subf %50, %53 : vector<8x8xf32>
    %55 = math.exp %54 : vector<8x8xf32>
    %cst_21 = arith.constant 0.000000e+00 : f32
    %56 = vector.broadcast %cst_21 : f32 to vector<8x8xf32>
    %57 = arith.select %39, %55, %56 : vector<8x8xi1>, vector<8x8xf32>
    %cst_22 = arith.constant dense<0.000000e+00> : vector<8xf32>
    %58 = vector.multi_reduction <add>, %57, %cst_22 [1] : vector<8x8xf32> to vector<8xf32>
    %59 = vector.shape_cast %58 : vector<8xf32> to vector<8x1xf32>
    %cst_23 = arith.constant 0.000000e+00 : f32
    %60 = vector.broadcast %cst_23 : f32 to vector<8x1xf32>
    %61 = arith.cmpf ogt, %59, %60 : vector<8x1xf32>
    %cst_24 = arith.constant 1.000000e+00 : f32
    %62 = vector.broadcast %cst_24 : f32 to vector<8x1xf32>
    %63 = arith.select %61, %59, %62 : vector<8x1xi1>, vector<8x1xf32>
    %64 = tpu.reciprocal %63 {approx = true} : vector<8x1xf32> -> vector<8x1xf32>
    %65 = arith.truncf %57 : vector<8x8xf32> to vector<8x8xbf16>
    %cst_25 = arith.constant dense<0.000000e+00> : vector<8x16xf32>
    %66 = tpu.matmul %65, %45, %cst_25 {dimension_numbers = #tpu.dot_dimension_numbers<[1], [0], [0], [1], [0, 0, 1, 1], [], []>} : vector<8x8xbf16>, vector<8x16xbf16>, vector<8x16xf32> -> vector<8x16xf32>
    %67 = vector.broadcast %64 : vector<8x1xf32> to vector<8x16xf32>
    %68 = arith.mulf %66, %67 : vector<8x16xf32>
    %69 = vector.extract_strided_slice %24 {offsets = [0, 16], sizes = [8, 16], strides = [1, 1]} : vector<8x64xf32> to vector<8x16xf32>
    %70 = arith.truncf %69 : vector<8x16xf32> to vector<8x16xbf16>
    %71 = vector.extract_strided_slice %29 {offsets = [0, 16], sizes = [8, 16], strides = [1, 1]} : vector<8x64xf32> to vector<8x16xf32>
    %72 = arith.truncf %71 : vector<8x16xf32> to vector<8x16xbf16>
    %73 = vector.extract_strided_slice %30 {offsets = [0, 16], sizes = [8, 16], strides = [1, 1]} : vector<8x64xf32> to vector<8x16xf32>
    %74 = arith.truncf %73 : vector<8x16xf32> to vector<8x16xbf16>
    %cst_26 = arith.constant dense<0.000000e+00> : vector<8x8xf32>
    %75 = tpu.matmul %70, %72, %cst_26 {dimension_numbers = #tpu.dot_dimension_numbers<[1], [1], [0], [0], [0, 0, 1, 0], [], []>} : vector<8x16xbf16>, vector<8x16xbf16>, vector<8x8xf32> -> vector<8x8xf32>
    %cst_27 = arith.constant 2.500000e-01 : f32
    %76 = vector.broadcast %cst_27 : f32 to vector<8x8xf32>
    %77 = arith.mulf %75, %76 : vector<8x8xf32>
    %cst_28 = arith.constant -1.000000e+30 : f32
    %78 = vector.broadcast %cst_28 : f32 to vector<8x8xf32>
    %79 = arith.select %39, %77, %78 : vector<8x8xi1>, vector<8x8xf32>
    %cst_29 = arith.constant dense<0xFF800000> : vector<8xf32>
    %80 = vector.multi_reduction <maximumf>, %79, %cst_29 [1] : vector<8x8xf32> to vector<8xf32>
    %81 = vector.shape_cast %80 : vector<8xf32> to vector<8x1xf32>
    %82 = vector.broadcast %81 : vector<8x1xf32> to vector<8x8xf32>
    %83 = arith.subf %79, %82 : vector<8x8xf32>
    %84 = math.exp %83 : vector<8x8xf32>
    %cst_30 = arith.constant 0.000000e+00 : f32
    %85 = vector.broadcast %cst_30 : f32 to vector<8x8xf32>
    %86 = arith.select %39, %84, %85 : vector<8x8xi1>, vector<8x8xf32>
    %cst_31 = arith.constant dense<0.000000e+00> : vector<8xf32>
    %87 = vector.multi_reduction <add>, %86, %cst_31 [1] : vector<8x8xf32> to vector<8xf32>
    %88 = vector.shape_cast %87 : vector<8xf32> to vector<8x1xf32>
    %cst_32 = arith.constant 0.000000e+00 : f32
    %89 = vector.broadcast %cst_32 : f32 to vector<8x1xf32>
    %90 = arith.cmpf ogt, %88, %89 : vector<8x1xf32>
    %cst_33 = arith.constant 1.000000e+00 : f32
    %91 = vector.broadcast %cst_33 : f32 to vector<8x1xf32>
    %92 = arith.select %90, %88, %91 : vector<8x1xi1>, vector<8x1xf32>
    %93 = tpu.reciprocal %92 {approx = true} : vector<8x1xf32> -> vector<8x1xf32>
    %94 = arith.truncf %86 : vector<8x8xf32> to vector<8x8xbf16>
    %cst_34 = arith.constant dense<0.000000e+00> : vector<8x16xf32>
    %95 = tpu.matmul %94, %74, %cst_34 {dimension_numbers = #tpu.dot_dimension_numbers<[1], [0], [0], [1], [0, 0, 1, 1], [], []>} : vector<8x8xbf16>, vector<8x16xbf16>, vector<8x16xf32> -> vector<8x16xf32>
    %96 = vector.broadcast %93 : vector<8x1xf32> to vector<8x16xf32>
    %97 = arith.mulf %95, %96 : vector<8x16xf32>
    %98 = vector.extract_strided_slice %24 {offsets = [0, 32], sizes = [8, 16], strides = [1, 1]} : vector<8x64xf32> to vector<8x16xf32>
    %99 = arith.truncf %98 : vector<8x16xf32> to vector<8x16xbf16>
    %100 = vector.extract_strided_slice %29 {offsets = [0, 32], sizes = [8, 16], strides = [1, 1]} : vector<8x64xf32> to vector<8x16xf32>
    %101 = arith.truncf %100 : vector<8x16xf32> to vector<8x16xbf16>
    %102 = vector.extract_strided_slice %30 {offsets = [0, 32], sizes = [8, 16], strides = [1, 1]} : vector<8x64xf32> to vector<8x16xf32>
    %103 = arith.truncf %102 : vector<8x16xf32> to vector<8x16xbf16>
    %cst_35 = arith.constant dense<0.000000e+00> : vector<8x8xf32>
    %104 = tpu.matmul %99, %101, %cst_35 {dimension_numbers = #tpu.dot_dimension_numbers<[1], [1], [0], [0], [0, 0, 1, 0], [], []>} : vector<8x16xbf16>, vector<8x16xbf16>, vector<8x8xf32> -> vector<8x8xf32>
    %cst_36 = arith.constant 2.500000e-01 : f32
    %105 = vector.broadcast %cst_36 : f32 to vector<8x8xf32>
    %106 = arith.mulf %104, %105 : vector<8x8xf32>
    %cst_37 = arith.constant -1.000000e+30 : f32
    %107 = vector.broadcast %cst_37 : f32 to vector<8x8xf32>
    %108 = arith.select %39, %106, %107 : vector<8x8xi1>, vector<8x8xf32>
    %cst_38 = arith.constant dense<0xFF800000> : vector<8xf32>
    %109 = vector.multi_reduction <maximumf>, %108, %cst_38 [1] : vector<8x8xf32> to vector<8xf32>
    %110 = vector.shape_cast %109 : vector<8xf32> to vector<8x1xf32>
    %111 = vector.broadcast %110 : vector<8x1xf32> to vector<8x8xf32>
    %112 = arith.subf %108, %111 : vector<8x8xf32>
    %113 = math.exp %112 : vector<8x8xf32>
    %cst_39 = arith.constant 0.000000e+00 : f32
    %114 = vector.broadcast %cst_39 : f32 to vector<8x8xf32>
    %115 = arith.select %39, %113, %114 : vector<8x8xi1>, vector<8x8xf32>
    %cst_40 = arith.constant dense<0.000000e+00> : vector<8xf32>
    %116 = vector.multi_reduction <add>, %115, %cst_40 [1] : vector<8x8xf32> to vector<8xf32>
    %117 = vector.shape_cast %116 : vector<8xf32> to vector<8x1xf32>
    %cst_41 = arith.constant 0.000000e+00 : f32
    %118 = vector.broadcast %cst_41 : f32 to vector<8x1xf32>
    %119 = arith.cmpf ogt, %117, %118 : vector<8x1xf32>
    %cst_42 = arith.constant 1.000000e+00 : f32
    %120 = vector.broadcast %cst_42 : f32 to vector<8x1xf32>
    %121 = arith.select %119, %117, %120 : vector<8x1xi1>, vector<8x1xf32>
    %122 = tpu.reciprocal %121 {approx = true} : vector<8x1xf32> -> vector<8x1xf32>
    %123 = arith.truncf %115 : vector<8x8xf32> to vector<8x8xbf16>
    %cst_43 = arith.constant dense<0.000000e+00> : vector<8x16xf32>
    %124 = tpu.matmul %123, %103, %cst_43 {dimension_numbers = #tpu.dot_dimension_numbers<[1], [0], [0], [1], [0, 0, 1, 1], [], []>} : vector<8x8xbf16>, vector<8x16xbf16>, vector<8x16xf32> -> vector<8x16xf32>
    %125 = vector.broadcast %122 : vector<8x1xf32> to vector<8x16xf32>
    %126 = arith.mulf %124, %125 : vector<8x16xf32>
    %127 = vector.extract_strided_slice %24 {offsets = [0, 48], sizes = [8, 16], strides = [1, 1]} : vector<8x64xf32> to vector<8x16xf32>
    %128 = arith.truncf %127 : vector<8x16xf32> to vector<8x16xbf16>
    %129 = vector.extract_strided_slice %29 {offsets = [0, 48], sizes = [8, 16], strides = [1, 1]} : vector<8x64xf32> to vector<8x16xf32>
    %130 = arith.truncf %129 : vector<8x16xf32> to vector<8x16xbf16>
    %131 = vector.extract_strided_slice %30 {offsets = [0, 48], sizes = [8, 16], strides = [1, 1]} : vector<8x64xf32> to vector<8x16xf32>
    %132 = arith.truncf %131 : vector<8x16xf32> to vector<8x16xbf16>
    %cst_44 = arith.constant dense<0.000000e+00> : vector<8x8xf32>
    %133 = tpu.matmul %128, %130, %cst_44 {dimension_numbers = #tpu.dot_dimension_numbers<[1], [1], [0], [0], [0, 0, 1, 0], [], []>} : vector<8x16xbf16>, vector<8x16xbf16>, vector<8x8xf32> -> vector<8x8xf32>
    %cst_45 = arith.constant 2.500000e-01 : f32
    %134 = vector.broadcast %cst_45 : f32 to vector<8x8xf32>
    %135 = arith.mulf %133, %134 : vector<8x8xf32>
    %cst_46 = arith.constant -1.000000e+30 : f32
    %136 = vector.broadcast %cst_46 : f32 to vector<8x8xf32>
    %137 = arith.select %39, %135, %136 : vector<8x8xi1>, vector<8x8xf32>
    %cst_47 = arith.constant dense<0xFF800000> : vector<8xf32>
    %138 = vector.multi_reduction <maximumf>, %137, %cst_47 [1] : vector<8x8xf32> to vector<8xf32>
    %139 = vector.shape_cast %138 : vector<8xf32> to vector<8x1xf32>
    %140 = vector.broadcast %139 : vector<8x1xf32> to vector<8x8xf32>
    %141 = arith.subf %137, %140 : vector<8x8xf32>
    %142 = math.exp %141 : vector<8x8xf32>
    %cst_48 = arith.constant 0.000000e+00 : f32
    %143 = vector.broadcast %cst_48 : f32 to vector<8x8xf32>
    %144 = arith.select %39, %142, %143 : vector<8x8xi1>, vector<8x8xf32>
    %cst_49 = arith.constant dense<0.000000e+00> : vector<8xf32>
    %145 = vector.multi_reduction <add>, %144, %cst_49 [1] : vector<8x8xf32> to vector<8xf32>
    %146 = vector.shape_cast %145 : vector<8xf32> to vector<8x1xf32>
    %cst_50 = arith.constant 0.000000e+00 : f32
    %147 = vector.broadcast %cst_50 : f32 to vector<8x1xf32>
    %148 = arith.cmpf ogt, %146, %147 : vector<8x1xf32>
    %cst_51 = arith.constant 1.000000e+00 : f32
    %149 = vector.broadcast %cst_51 : f32 to vector<8x1xf32>
    %150 = arith.select %148, %146, %149 : vector<8x1xi1>, vector<8x1xf32>
    %151 = tpu.reciprocal %150 {approx = true} : vector<8x1xf32> -> vector<8x1xf32>
    %152 = arith.truncf %144 : vector<8x8xf32> to vector<8x8xbf16>
    %cst_52 = arith.constant dense<0.000000e+00> : vector<8x16xf32>
    %153 = tpu.matmul %152, %132, %cst_52 {dimension_numbers = #tpu.dot_dimension_numbers<[1], [0], [0], [1], [0, 0, 1, 1], [], []>} : vector<8x8xbf16>, vector<8x16xbf16>, vector<8x16xf32> -> vector<8x16xf32>
    %154 = vector.broadcast %151 : vector<8x1xf32> to vector<8x16xf32>
    %155 = arith.mulf %153, %154 : vector<8x16xf32>
    %156 = tpu.concatenate %68, %97, %126, %155 in 1 : vector<8x16xf32>, vector<8x16xf32>, vector<8x16xf32>, vector<8x16xf32> -> vector<8x64xf32>
    %157 = arith.truncf %156 : vector<8x64xf32> to vector<8x64xbf16>
    %c0_53 = arith.constant 0 : index
    %c0_54 = arith.constant 0 : index
    %158 = vector.load %arg5[%c0_53, %c0_54] : memref<64x64xbf16, #tpu.memory_space<vmem>>, vector<64x64xbf16>
    %cst_55 = arith.constant dense<0.000000e+00> : vector<8x64xf32>
    %159 = tpu.matmul %157, %158, %cst_55 {dimension_numbers = #tpu.dot_dimension_numbers<[1], [0], [0], [1], [0, 0, 1, 1], [], []>} : vector<8x64xbf16>, vector<64x64xbf16>, vector<8x64xf32> -> vector<8x64xf32>
    %160 = arith.addf %1, %159 : vector<8x64xf32>
    %c0_56 = arith.constant 0 : index
    %c0_57 = arith.constant 0 : index
    %c0_58 = arith.constant 0 : index
    %161 = vector.load %arg8[%c0_56, %c0_57, %c0_58] : memref<1x8x64xf32, #tpu.memory_space<vmem>>, vector<1x8x64xf32>
    %162 = vector.shape_cast %161 : vector<1x8x64xf32> to vector<8x64xf32>
    %163 = vector.shape_cast %160 : vector<8x64xf32> to vector<1x8x64xf32>
    tpu.vector_store %arg8[%c0_56, %c0_57, %c0_58], %163 {strides = array<i32>} : memref<1x8x64xf32, #tpu.memory_space<vmem>>, vector<1x8x64xf32>,
    return
  }
  func.func @transform_0(%arg0: i32) -> (i32, i32, i32) {
    %c0_i32 = arith.constant 0 : i32
    %c0_i32_0 = arith.constant 0 : i32
    %c0_i32_1 = arith.constant 0 : i32
    return %arg0, %c0_i32, %c0_i32_0 : i32, i32, i32
  }
  func.func @transform_1(%arg0: i32) -> (i32, i32, i32) {
    %c0_i32 = arith.constant 0 : i32
    %c0_i32_0 = arith.constant 0 : i32
    %c0_i32_1 = arith.constant 0 : i32
    return %arg0, %c0_i32, %c0_i32_0 : i32, i32, i32
  }
  func.func @transform_2(%arg0: i32) -> (i32, i32) {
    %c0_i32 = arith.constant 0 : i32
    %c0_i32_0 = arith.constant 0 : i32
    %c0_i32_1 = arith.constant 0 : i32
    return %c0_i32, %c0_i32_0 : i32, i32
  }
  func.func @transform_3(%arg0: i32) -> (i32, i32) {
    %c0_i32 = arith.constant 0 : i32
    %c0_i32_0 = arith.constant 0 : i32
    %c0_i32_1 = arith.constant 0 : i32
    return %c0_i32, %c0_i32_0 : i32, i32
  }
  func.func @transform_4(%arg0: i32) -> (i32, i32) {
    %c0_i32 = arith.constant 0 : i32
    %c0_i32_0 = arith.constant 0 : i32
    %c0_i32_1 = arith.constant 0 : i32
    return %c0_i32, %c0_i32_0 : i32, i32
  }
  func.func @transform_5(%arg0: i32) -> (i32, i32) {
    %c0_i32 = arith.constant 0 : i32
    %c0_i32_0 = arith.constant 0 : i32
    %c0_i32_1 = arith.constant 0 : i32
    return %c0_i32, %c0_i32_0 : i32, i32
  }
  func.func @transform_6(%arg0: i32) -> (i32, i32) {
    %c0_i32 = arith.constant 0 : i32
    %c0_i32_0 = arith.constant 0 : i32
    %c0_i32_1 = arith.constant 0 : i32
    return %c0_i32, %c0_i32_0 : i32, i32
  }
  func.func @transform_7(%arg0: i32) -> (i32, i32, i32) {
    %c0_i32 = arith.constant 0 : i32
    %c0_i32_0 = arith.constant 0 : i32
    %c0_i32_1 = arith.constant 0 : i32
    return %arg0, %c0_i32, %c0_i32_0 : i32, i32, i32
  }
}

module attributes {stable_mosaic.version = 11 : i64} {
  func.func @_head_kernel(%arg0: i32, %arg1: memref<1x8x64xf32, #tpu.memory_space<vmem>>, %arg2: memref<1x64xf32, #tpu.memory_space<vmem>>, %arg3: memref<64x256xbf16, #tpu.memory_space<vmem>>, %arg4: memref<1x8x64xf32, #tpu.memory_space<vmem>>, %arg5: memref<1x8x256xf32, #tpu.memory_space<vmem>>) attributes {dimension_semantics = [#tpu.dimension_semantics<parallel>], iteration_bounds = array<i64: 2>, scalar_prefetch = 0 : i64, scratch_operands = 0 : i64, tpu.core_type = #tpu.core_type<tc>, window_params = [{transform_indices = @transform_0, window_bounds = array<i64: 1, 8, 64>}, {pipeline_mode = #tpu.pipeline_mode<synchronous>, transform_indices = @transform_1, window_bounds = array<i64: 1, 64>}, {pipeline_mode = #tpu.pipeline_mode<synchronous>, transform_indices = @transform_2, window_bounds = array<i64: 64, 256>}, {transform_indices = @transform_3, window_bounds = array<i64: 1, 8, 64>}, {transform_indices = @transform_4, window_bounds = array<i64: 1, 8, 256>}]} {
    %c0 = arith.constant 0 : index
    %c0_0 = arith.constant 0 : index
    %c0_1 = arith.constant 0 : index
    %0 = vector.load %arg1[%c0, %c0_0, %c0_1] : memref<1x8x64xf32, #tpu.memory_space<vmem>>, vector<1x8x64xf32>
    %1 = vector.shape_cast %0 : vector<1x8x64xf32> to vector<8x64xf32>
    %c0_2 = arith.constant 0 : index
    %c0_3 = arith.constant 0 : index
    %2 = vector.load %arg2[%c0_2, %c0_3] : memref<1x64xf32, #tpu.memory_space<vmem>>, vector<1x64xf32>
    %3 = arith.mulf %1, %1 : vector<8x64xf32>
    %cst = arith.constant dense<0.000000e+00> : vector<8xf32>
    %4 = vector.multi_reduction <add>, %3, %cst [1] : vector<8x64xf32> to vector<8xf32>
    %5 = vector.shape_cast %4 : vector<8xf32> to vector<8x1xf32>
    %cst_4 = arith.constant 6.400000e+01 : f32
    %6 = vector.broadcast %cst_4 : f32 to vector<8x1xf32>
    %7 = arith.divf %5, %6 : vector<8x1xf32>
    %cst_5 = arith.constant 9.99999974E-6 : f32
    %8 = vector.broadcast %cst_5 : f32 to vector<8x1xf32>
    %9 = arith.addf %7, %8 : vector<8x1xf32>
    %10 = math.rsqrt %9 : vector<8x1xf32>
    %11 = vector.broadcast %10 : vector<8x1xf32> to vector<8x64xf32>
    %12 = arith.mulf %1, %11 : vector<8x64xf32>
    %13 = vector.broadcast %2 : vector<1x64xf32> to vector<8x64xf32>
    %14 = arith.mulf %12, %13 : vector<8x64xf32>
    %c0_6 = arith.constant 0 : index
    %c0_7 = arith.constant 0 : index
    %c0_8 = arith.constant 0 : index
    %15 = vector.load %arg4[%c0_6, %c0_7, %c0_8] : memref<1x8x64xf32, #tpu.memory_space<vmem>>, vector<1x8x64xf32>
    %16 = vector.shape_cast %15 : vector<1x8x64xf32> to vector<8x64xf32>
    %17 = vector.shape_cast %14 : vector<8x64xf32> to vector<1x8x64xf32>
    tpu.vector_store %arg4[%c0_6, %c0_7, %c0_8], %17 {strides = array<i32>} : memref<1x8x64xf32, #tpu.memory_space<vmem>>, vector<1x8x64xf32>,
    %18 = arith.truncf %14 : vector<8x64xf32> to vector<8x64xbf16>
    %c0_9 = arith.constant 0 : index
    %c0_10 = arith.constant 0 : index
    %19 = vector.load %arg3[%c0_9, %c0_10] : memref<64x256xbf16, #tpu.memory_space<vmem>>, vector<64x256xbf16>
    %cst_11 = arith.constant dense<0.000000e+00> : vector<8x256xf32>
    %20 = tpu.matmul %18, %19, %cst_11 {dimension_numbers = #tpu.dot_dimension_numbers<[1], [0], [0], [1], [0, 0, 1, 1], [], []>} : vector<8x64xbf16>, vector<64x256xbf16>, vector<8x256xf32> -> vector<8x256xf32>
    %c0_12 = arith.constant 0 : index
    %c0_13 = arith.constant 0 : index
    %c0_14 = arith.constant 0 : index
    %21 = vector.load %arg5[%c0_12, %c0_13, %c0_14] : memref<1x8x256xf32, #tpu.memory_space<vmem>>, vector<1x8x256xf32>
    %22 = vector.shape_cast %21 : vector<1x8x256xf32> to vector<8x256xf32>
    %23 = vector.shape_cast %20 : vector<8x256xf32> to vector<1x8x256xf32>
    tpu.vector_store %arg5[%c0_12, %c0_13, %c0_14], %23 {strides = array<i32>} : memref<1x8x256xf32, #tpu.memory_space<vmem>>, vector<1x8x256xf32>,
    return
  }
  func.func @transform_0(%arg0: i32) -> (i32, i32, i32) {
    %c0_i32 = arith.constant 0 : i32
    %c0_i32_0 = arith.constant 0 : i32
    %c0_i32_1 = arith.constant 0 : i32
    return %arg0, %c0_i32, %c0_i32_0 : i32, i32, i32
  }
  func.func @transform_1(%arg0: i32) -> (i32, i32) {
    %c0_i32 = arith.constant 0 : i32
    %c0_i32_0 = arith.constant 0 : i32
    %c0_i32_1 = arith.constant 0 : i32
    return %c0_i32, %c0_i32_0 : i32, i32
  }
  func.func @transform_2(%arg0: i32) -> (i32, i32) {
    %c0_i32 = arith.constant 0 : i32
    %c0_i32_0 = arith.constant 0 : i32
    %c0_i32_1 = arith.constant 0 : i32
    return %c0_i32, %c0_i32_0 : i32, i32
  }
  func.func @transform_3(%arg0: i32) -> (i32, i32, i32) {
    %c0_i32 = arith.constant 0 : i32
    %c0_i32_0 = arith.constant 0 : i32
    %c0_i32_1 = arith.constant 0 : i32
    return %arg0, %c0_i32, %c0_i32_0 : i32, i32, i32
  }
  func.func @transform_4(%arg0: i32) -> (i32, i32, i32) {
    %c0_i32 = arith.constant 0 : i32
    %c0_i32_0 = arith.constant 0 : i32
    %c0_i32_1 = arith.constant 0 : i32
    return %arg0, %c0_i32, %c0_i32_0 : i32, i32, i32
  }
}

module attributes {stable_mosaic.version = 11 : i64} {
  func.func @_mlp_block_kernel(%arg0: i32, %arg1: memref<1x8x64xf32, #tpu.memory_space<vmem>>, %arg2: memref<1x64xf32, #tpu.memory_space<vmem>>, %arg3: memref<64x256xbf16, #tpu.memory_space<vmem>>, %arg4: memref<128x64xbf16, #tpu.memory_space<vmem>>, %arg5: memref<1x8x64xf32, #tpu.memory_space<vmem>>) attributes {dimension_semantics = [#tpu.dimension_semantics<parallel>], iteration_bounds = array<i64: 2>, scalar_prefetch = 0 : i64, scratch_operands = 0 : i64, tpu.core_type = #tpu.core_type<tc>, window_params = [{transform_indices = @transform_0, window_bounds = array<i64: 1, 8, 64>}, {pipeline_mode = #tpu.pipeline_mode<synchronous>, transform_indices = @transform_1, window_bounds = array<i64: 1, 64>}, {pipeline_mode = #tpu.pipeline_mode<synchronous>, transform_indices = @transform_2, window_bounds = array<i64: 64, 256>}, {pipeline_mode = #tpu.pipeline_mode<synchronous>, transform_indices = @transform_3, window_bounds = array<i64: 128, 64>}, {transform_indices = @transform_4, window_bounds = array<i64: 1, 8, 64>}]} {
    %c0 = arith.constant 0 : index
    %c0_0 = arith.constant 0 : index
    %c0_1 = arith.constant 0 : index
    %0 = vector.load %arg1[%c0, %c0_0, %c0_1] : memref<1x8x64xf32, #tpu.memory_space<vmem>>, vector<1x8x64xf32>
    %1 = vector.shape_cast %0 : vector<1x8x64xf32> to vector<8x64xf32>
    %c0_2 = arith.constant 0 : index
    %c0_3 = arith.constant 0 : index
    %2 = vector.load %arg2[%c0_2, %c0_3] : memref<1x64xf32, #tpu.memory_space<vmem>>, vector<1x64xf32>
    %3 = arith.mulf %1, %1 : vector<8x64xf32>
    %cst = arith.constant dense<0.000000e+00> : vector<8xf32>
    %4 = vector.multi_reduction <add>, %3, %cst [1] : vector<8x64xf32> to vector<8xf32>
    %5 = vector.shape_cast %4 : vector<8xf32> to vector<8x1xf32>
    %cst_4 = arith.constant 6.400000e+01 : f32
    %6 = vector.broadcast %cst_4 : f32 to vector<8x1xf32>
    %7 = arith.divf %5, %6 : vector<8x1xf32>
    %cst_5 = arith.constant 9.99999974E-6 : f32
    %8 = vector.broadcast %cst_5 : f32 to vector<8x1xf32>
    %9 = arith.addf %7, %8 : vector<8x1xf32>
    %10 = math.rsqrt %9 : vector<8x1xf32>
    %11 = vector.broadcast %10 : vector<8x1xf32> to vector<8x64xf32>
    %12 = arith.mulf %1, %11 : vector<8x64xf32>
    %13 = vector.broadcast %2 : vector<1x64xf32> to vector<8x64xf32>
    %14 = arith.mulf %12, %13 : vector<8x64xf32>
    %15 = arith.truncf %14 : vector<8x64xf32> to vector<8x64xbf16>
    %c0_6 = arith.constant 0 : index
    %c0_7 = arith.constant 0 : index
    %16 = vector.load %arg3[%c0_6, %c0_7] : memref<64x256xbf16, #tpu.memory_space<vmem>>, vector<64x256xbf16>
    %cst_8 = arith.constant dense<0.000000e+00> : vector<8x256xf32>
    %17 = tpu.matmul %15, %16, %cst_8 {dimension_numbers = #tpu.dot_dimension_numbers<[1], [0], [0], [1], [0, 0, 1, 1], [], []>} : vector<8x64xbf16>, vector<64x256xbf16>, vector<8x256xf32> -> vector<8x256xf32>
    %18 = vector.extract_strided_slice %17 {offsets = [0, 0], sizes = [8, 128], strides = [1, 1]} : vector<8x256xf32> to vector<8x128xf32>
    %19 = vector.extract_strided_slice %17 {offsets = [0, 128], sizes = [8, 128], strides = [1, 1]} : vector<8x256xf32> to vector<8x128xf32>
    %20 = arith.negf %18 : vector<8x128xf32>
    %21 = math.exp %20 : vector<8x128xf32>
    %cst_9 = arith.constant 1.000000e+00 : f32
    %22 = vector.broadcast %cst_9 : f32 to vector<8x128xf32>
    %23 = arith.addf %22, %21 : vector<8x128xf32>
    %24 = arith.divf %22, %23 : vector<8x128xf32>
    %25 = arith.mulf %18, %24 : vector<8x128xf32>
    %26 = arith.mulf %25, %19 : vector<8x128xf32>
    %27 = arith.truncf %26 : vector<8x128xf32> to vector<8x128xbf16>
    %c0_10 = arith.constant 0 : index
    %c0_11 = arith.constant 0 : index
    %28 = vector.load %arg4[%c0_10, %c0_11] : memref<128x64xbf16, #tpu.memory_space<vmem>>, vector<128x64xbf16>
    %cst_12 = arith.constant dense<0.000000e+00> : vector<8x64xf32>
    %29 = tpu.matmul %27, %28, %cst_12 {dimension_numbers = #tpu.dot_dimension_numbers<[1], [0], [0], [1], [0, 0, 1, 1], [], []>} : vector<8x128xbf16>, vector<128x64xbf16>, vector<8x64xf32> -> vector<8x64xf32>
    %30 = arith.addf %1, %29 : vector<8x64xf32>
    %c0_13 = arith.constant 0 : index
    %c0_14 = arith.constant 0 : index
    %c0_15 = arith.constant 0 : index
    %31 = vector.load %arg5[%c0_13, %c0_14, %c0_15] : memref<1x8x64xf32, #tpu.memory_space<vmem>>, vector<1x8x64xf32>
    %32 = vector.shape_cast %31 : vector<1x8x64xf32> to vector<8x64xf32>
    %33 = vector.shape_cast %30 : vector<8x64xf32> to vector<1x8x64xf32>
    tpu.vector_store %arg5[%c0_13, %c0_14, %c0_15], %33 {strides = array<i32>} : memref<1x8x64xf32, #tpu.memory_space<vmem>>, vector<1x8x64xf32>,
    return
  }
  func.func @transform_0(%arg0: i32) -> (i32, i32, i32) {
    %c0_i32 = arith.constant 0 : i32
    %c0_i32_0 = arith.constant 0 : i32
    %c0_i32_1 = arith.constant 0 : i32
    return %arg0, %c0_i32, %c0_i32_0 : i32, i32, i32
  }
  func.func @transform_1(%arg0: i32) -> (i32, i32) {
    %c0_i32 = arith.constant 0 : i32
    %c0_i32_0 = arith.constant 0 : i32
    %c0_i32_1 = arith.constant 0 : i32
    return %c0_i32, %c0_i32_0 : i32, i32
  }
  func.func @transform_2(%arg0: i32) -> (i32, i32) {
    %c0_i32 = arith.constant 0 : i32
    %c0_i32_0 = arith.constant 0 : i32
    %c0_i32_1 = arith.constant 0 : i32
    return %c0_i32, %c0_i32_0 : i32, i32
  }
  func.func @transform_3(%arg0: i32) -> (i32, i32) {
    %c0_i32 = arith.constant 0 : i32
    %c0_i32_0 = arith.constant 0 : i32
    %c0_i32_1 = arith.constant 0 : i32
    return %c0_i32, %c0_i32_0 : i32, i32
  }
  func.func @transform_4(%arg0: i32) -> (i32, i32, i32) {
    %c0_i32 = arith.constant 0 : i32
    %c0_i32_0 = arith.constant 0 : i32
    %c0_i32_1 = arith.constant 0 : i32
    return %arg0, %c0_i32, %c0_i32_0 : i32, i32, i32
  }
}

</mosaic_0001>

<llo_original>
// kernel: tile.14
$region0: #{tile.14}
  %s0 = inlined_call_operand.vmem [shape: f32[8,4,16], index: 0, kind: input, shape index: {}]
  %s1 = inlined_call_operand.vmem [shape: f32[8,64], index: 1, kind: output, shape index: {}]
  $region1: #{tile.14} parent=0
    #allocation0 [shape = 'u8[32768]{0}', space=vmem, size = 0x8000, scoped, tag = 'scoped mem for input reshape']
    %s3 = ssub.s32 16, 1
    %s4 = scalar_lea.vmem %s0, 28
    %v5 = vld [vmem:[%s4] sm:%s3]
    %s6 = scalar_lea.vmem [#allocation0], 56
    %7 = vst [vmem:[%s6] sm:%s3] %v5
    %s8 = scalar_lea.vmem %s0, 24
    %v9 = vld [vmem:[%s8] sm:%s3]
    %s10 = scalar_lea.vmem [#allocation0], 48
    %11 = vst [vmem:[%s10] sm:%s3] %v9
    %s12 = scalar_lea.vmem %s0, 20
    %v13 = vld [vmem:[%s12] sm:%s3]
    %s14 = scalar_lea.vmem [#allocation0], 40
    %15 = vst [vmem:[%s14] sm:%s3] %v13
    %s16 = scalar_lea.vmem %s0, 16
    %v17 = vld [vmem:[%s16] sm:%s3]
    %s18 = scalar_lea.vmem [#allocation0], 32
    %19 = vst [vmem:[%s18] sm:%s3] %v17
    %s20 = scalar_lea.vmem %s0, 12
    %v21 = vld [vmem:[%s20] sm:%s3]
    %s22 = scalar_lea.vmem [#allocation0], 24
    %23 = vst [vmem:[%s22] sm:%s3] %v21
    %s24 = scalar_lea.vmem %s0, 8
    %v25 = vld [vmem:[%s24] sm:%s3]
    %s26 = scalar_lea.vmem [#allocation0], 16
    %27 = vst [vmem:[%s26] sm:%s3] %v25
    %s28 = scalar_lea.vmem %s0, 4
    %v29 = vld [vmem:[%s28] sm:%s3]
    %s30 = scalar_lea.vmem [#allocation0], 8
    %31 = vst [vmem:[%s30] sm:%s3] %v29
    %v32 = vld [vmem:[%s0] sm:%s3]
    %33 = vst [vmem:[#allocation0] sm:%s3] %v32
    %v34 = vld [vmem:[#allocation0] ss:$8 sm:$0xf]
    %v35 = vld [vmem:[#allocation0] ss:$8 sm:$0xf0]
    %vm36 = vcmask 1047556
    %v37 = vsel %vm36, %v35, %v34
    %vm38 = vcmask 130048
    %39 = vst.msk [vmem:[%s1] sm:$0xff] %vm38, %v37
    %s40 = scalar_lea.vmem [#allocation0], 3
    %v41 = vld [vmem:[%s40] ss:$8 sm:$0xf]
    %s42 = scalar_lea.vmem [#allocation0], 3
    %v43 = vld [vmem:[%s42] ss:$8 sm:$0xf0]
    %vm44 = vcmask 1047556
    %v45 = vsel %vm44, %v43, %v41
    %46 = vrot.lane.b32.xlu0 %v45, 48
    %v47 = vpop.permute.xlu0 %46
    %vm48 = vcmask 523648
    %49 = vst.msk [vmem:[%s1] sm:$0xff] %vm48, %v47
    %s50 = scalar_lea.vmem [#allocation0], 2
    %v51 = vld [vmem:[%s50] ss:$8 sm:$0xf]
    %s52 = scalar_lea.vmem [#allocation0], 2
    %v53 = vld [vmem:[%s52] ss:$8 sm:$0xf0]
    %vm54 = vcmask 1047556
    %v55 = vsel %vm54, %v53, %v51
    %56 = vrot.lane.b32.xlu0 %v55, 32
    %v57 = vpop.permute.xlu0 %56
    %vm58 = vcmask 392448
    %59 = vst.msk [vmem:[%s1] sm:$0xff] %vm58, %v57
    %s60 = scalar_lea.vmem [#allocation0], 1
    %v61 = vld [vmem:[%s60] ss:$8 sm:$0xf]
    %s62 = scalar_lea.vmem [#allocation0], 1
    %v63 = vld [vmem:[%s62] ss:$8 sm:$0xf0]
    %vm64 = vcmask 1047556
    %v65 = vsel %vm64, %v63, %v61
    %66 = vrot.lane.b32.xlu0 %v65, 16
    %v67 = vpop.permute.xlu0 %66
    %vm68 = vcmask 261248
    %69 = vst.msk [vmem:[%s1] sm:$0xff] %vm68, %v67

// kernel: llama_forward.9
$region0: #{llama_forward.9}
  #allocation0 [shape = 'u32[]', space=smem, size = 0x4, offset = 0x4, fixed_abs, tag = 'smem constant byte address 0x4 - core index']
  #allocation1 [shape = 'u32[72,128]{1,0:T(1,128)}', space=vmem, size = 0x9000, scoped, tag = 'internal scratch']
  %s0 = inlined_call_operand.vmem [shape: f32[2,8,64], index: 0, kind: input, shape index: {}]
  %s1 = inlined_call_operand.vmem [shape: f32[1,64], index: 1, kind: input, shape index: {}]
  %s2 = inlined_call_operand.vmem [shape: bf16[64,256], index: 2, kind: input, shape index: {}]
  %s3 = inlined_call_operand.hbm [shape: f32[2,8,64], index: 3, kind: output, shape index: {0}]
  %s4 = inlined_call_operand.vmem [shape: f32[2,8,256], index: 4, kind: output, shape index: {1}]
  %5 = xla_tuple %s3, %s4
  %s6 = sld [smem:[#allocation0]]
  $region53: #{llama_forward.9} parent=0
    _
  %s8 = ssub.s32 1, %s6
  %s9 = scalar_select 0, %s8, %s6
  $region1: #{llama_forward.9} parent=0
    #allocation2 [shape = 'u8[8192]{0}', space=vmem, size = 0x2000, scoped, tag = 'output window, operand 0']
    #allocation3 [shape = 's32[2]{0}', space=sflag, size = 0x8, scoped, tag = 'scoped memory for llama_forward.9']
    %10 = vsyncpa [#allocation3], 0
    %s11 = scalar_lea.sflag [#allocation3], 1
    %12 = vsyncpa %s11, 0
    loop: start=0, step=1, limit=4
    $region2: #{llama_forward.9} parent=1 // loop_pre_header
      _
    $region3: #{llama_forward.9} parent=1 // loop_header
      %s14 = sphi 0, %s18
      %p15 = scmp.ge.s32.totalorder %s14, 4
      %s24 = sphi 0, %s26
      %s27 = sphi 0, %s24
      %s28 = sphi 0, %s27
      %s44 = sphi 0, %s28
      %s48 = sphi 0, %s48
      %s50 = sphi 0, %s48
      %s51 = sphi 0, %s50
      %s65 = sphi 0, %s51
      %s69 = sphi 0, %s69
      %s71 = sphi 0, %s69
      %s72 = sphi 0, %s71
      %s86 = sphi 0, %s72
      %s92 = sphi 0, %s94
      %s95 = sphi 0, %s92
      %s96 = sphi 0, %s95
      %s112 = sphi 0, %s96
      %s118 = sphi 0, %s120
      %s121 = sphi 0, %s118
      %s122 = sphi 0, %s121
      %s138 = sphi 0, %s122
    $region4: #{llama_forward.9} parent=1 // loop_header_branch
      %17 = sbr.rel (%p15) target = $region8
    $region5: #{llama_forward.9} parent=1 // loop_body
      %s19 = ssub.s32 %s14, 1
      %s20 = ssub.s32 %s14, 2
      %s21 = sadd.s32 %s14, 1
      %s22 = ssub.s32 %s14, %s21
      %p23 = scmp.eq.s32.totalorder %s22, 0
      %s25 = sadd.s32 %s24, 1
      %s26 = scalar_select %p23, %s24, %s25
      %p29 = pneg %p23
      %p30 = scmp.eq.s32.totalorder %s14, 1
      %p31 = por %p29, %p30
      %p32 = scmp.ne.s32.totalorder %s24, %s27
      %p33 = scmp.eq.s32.totalorder %s14, 0
      %p34 = por %p32, %p33
      %p35 = scmp.ne.s32.totalorder %s24, %s27
      %p36 = scmp.eq.s32.totalorder %s19, 1
      %p37 = por %p35, %p36
      %p38 = scmp.ne.s32.totalorder %s27, %s28
      %p39 = scmp.eq.s32.totalorder %s19, 0
      %p40 = por %p38, %p39
      %p41 = scmp.ne.s32.totalorder %s27, %s28
      %p42 = scmp.eq.s32.totalorder %s20, 1
      %p43 = por %p41, %p42
      %p45 = scmp.ne.s32.totalorder %s28, %s44
      %p46 = scmp.eq.s32.totalorder %s20, 0
      %p47 = por %p45, %p46
      %s49 = sadd.s32 %s48, 1
      %p52 = scmp.eq.s32.totalorder %s14, 1
      %p53 = scmp.ne.s32.totalorder %s48, %s50
      %p54 = scmp.eq.s32.totalorder %s14, 0
      %p55 = por %p53, %p54
      %p56 = scmp.ne.s32.totalorder %s48, %s50
      %p57 = scmp.eq.s32.totalorder %s19, 1
      %p58 = por %p56, %p57
      %p59 = scmp.ne.s32.totalorder %s50, %s51
      %p60 = scmp.eq.s32.totalorder %s19, 0
      %p61 = por %p59, %p60
      %p62 = scmp.ne.s32.totalorder %s50, %s51
      %p63 = scmp.eq.s32.totalorder %s20, 1
      %p64 = por %p62, %p63
      %p66 = scmp.ne.s32.totalorder %s51, %s65
      %p67 = scmp.eq.s32.totalorder %s20, 0
      %p68 = por %p66, %p67
      %s70 = sadd.s32 %s69, 1
      %p73 = scmp.eq.s32.totalorder %s14, 1
      %p74 = scmp.ne.s32.totalorder %s69, %s71
      %p75 = scmp.eq.s32.totalorder %s14, 0
      %p76 = por %p74, %p75
      %p77 = scmp.ne.s32.totalorder %s69, %s71
      %p78 = scmp.eq.s32.totalorder %s19, 1
      %p79 = por %p77, %p78
      %p80 = scmp.ne.s32.totalorder %s71, %s72
      %p81 = scmp.eq.s32.totalorder %s19, 0
      %p82 = por %p80, %p81
      %p83 = scmp.ne.s32.totalorder %s71, %s72
      %p84 = scmp.eq.s32.totalorder %s20, 1
      %p85 = por %p83, %p84
      %p87 = scmp.ne.s32.totalorder %s72, %s86
      %p88 = scmp.eq.s32.totalorder %s20, 0
      %p89 = por %p87, %p88
      %s90 = ssub.s32 %s14, %s21
      %p91 = scmp.eq.s32.totalorder %s90, 0
      %s93 = sadd.s32 %s92, 1
      %s94 = scalar_select %p91, %s92, %s93
      %p97 = pneg %p91
      %p98 = scmp.eq.s32.totalorder %s14, 1
      %p99 = por %p97, %p98
      %p100 = scmp.ne.s32.totalorder %s92, %s95
      %p101 = scmp.eq.s32.totalorder %s14, 0
      %p102 = por %p100, %p101
      %p103 = scmp.ne.s32.totalorder %s92, %s95
      %p104 = scmp.eq.s32.totalorder %s19, 1
      %p105 = por %p103, %p104
      %p106 = scmp.ne.s32.totalorder %s95, %s96
      %p107 = scmp.eq.s32.totalorder %s19, 0
      %p108 = por %p106, %p107
      %p109 = scmp.ne.s32.totalorder %s95, %s96
      %p110 = scmp.eq.s32.totalorder %s20, 1
      %p111 = por %p109, %p110
      %p113 = scmp.ne.s32.totalorder %s96, %s112
      %p114 = scmp.eq.s32.totalorder %s20, 0
      %p115 = por %p113, %p114
      %s116 = ssub.s32 %s14, %s21
      %p117 = scmp.eq.s32.totalorder %s116, 0
      %s119 = sadd.s32 %s118, 1
      %s120 = scalar_select %p117, %s118, %s119
      %p123 = pneg %p117
      %p124 = scmp.eq.s32.totalorder %s14, 1
      %p125 = por %p123, %p124
      %p126 = scmp.ne.s32.totalorder %s118, %s121
      %p127 = scmp.eq.s32.totalorder %s14, 0
      %p128 = por %p126, %p127
      %p129 = scmp.ne.s32.totalorder %s118, %s121
      %p130 = scmp.eq.s32.totalorder %s19, 1
      %p131 = por %p129, %p130
      %p132 = scmp.ne.s32.totalorder %s121, %s122
      %p133 = scmp.eq.s32.totalorder %s19, 0
      %p134 = por %p132, %p133
      %p135 = scmp.ne.s32.totalorder %s121, %s122
      %p136 = scmp.eq.s32.totalorder %s20, 1
      %p137 = por %p135, %p136
      %p139 = scmp.ne.s32.totalorder %s122, %s138
      %p140 = scmp.eq.s32.totalorder %s20, 0
      %p141 = por %p139, %p140
      %p142 = scmp.le.s32.totalorder 1, %s14
      %p143 = scmp.lt.s32.totalorder %s14, 3
      %p144 = pnand %p142, %p143
      %p145 = pneg %p144
      // Predicated region
      $region9: #{llama_forward.9} parent=5 // pred_check
        _
      $region10: #{llama_forward.9} parent=5 // pred_check_branch
        %147 = sbr.rel (%p144) target = $region12
      $region11: #{llama_forward.9} parent=5 // pred_region
        %s148 = ssub.s32 %s14, 1
        // Predicated region
        $region13: #{llama_forward.9} parent=11 // pred_check
          %p149 = pneg %p61
        $region14: #{llama_forward.9} parent=11 // pred_check_branch
          %151 = sbr.rel (%p149) target = $region16
        $region15: #{llama_forward.9} parent=11 // pred_region
          _
        $region16: #{llama_forward.9} parent=11 // pred_fallthru
          _
        // Predicated region
        $region17: #{llama_forward.9} parent=11 // pred_check
          %p152 = pneg %p82
        $region18: #{llama_forward.9} parent=11 // pred_check_branch
          %154 = sbr.rel (%p152) target = $region20
        $region19: #{llama_forward.9} parent=11 // pred_region
          _
        $region20: #{llama_forward.9} parent=11 // pred_fallthru
          _
      $region12: #{llama_forward.9} parent=5 // pred_fallthru
        _
      %p155 = scmp.lt.s32.totalorder %s14, 2
      // Predicated region
      $region21: #{llama_forward.9} parent=5 // pred_check
        %p156 = pneg %p155
      $region22: #{llama_forward.9} parent=5 // pred_check_branch
        %158 = sbr.rel (%p156) target = $region24
      $region23: #{llama_forward.9} parent=5 // pred_region
        // Predicated region
        $region25: #{llama_forward.9} parent=23 // pred_check
          %p159 = pneg %p34
        $region26: #{llama_forward.9} parent=23 // pred_check_branch
          %161 = sbr.rel (%p159) target = $region28
        $region27: #{llama_forward.9} parent=23 // pred_region
          %p162 = scmp.lt.s32.totalorder %s14, 1
          %s163 = scalar_select %p162, %s14, 1
          %s164 = smul.addr %s163, 8
          %s165 = scalar_lea.vmem %s0, %s164
        $region28: #{llama_forward.9} parent=23 // pred_fallthru
          _
      $region24: #{llama_forward.9} parent=5 // pred_fallthru
        _
      %p166 = scmp.le.s32.totalorder 1, %s14
      %p167 = scmp.lt.s32.totalorder %s14, 3
      %p168 = pnand %p166, %p167
      %p169 = pneg %p168
      // Predicated region
      $region29: #{llama_forward.9} parent=5 // pred_check
        _
      $region30: #{llama_forward.9} parent=5 // pred_check_branch
        %171 = sbr.rel (%p168) target = $region32
      $region31: #{llama_forward.9} parent=5 // pred_region
        %s172 = ssub.s32 %s14, 1
        %p173 = scmp.lt.s32.totalorder %s19, 1
        %s174 = scalar_select %p173, %s19, 1
        %s175 = smul.addr %s174, 8
        %s176 = scalar_lea.vmem %s0, %s175
        %p177 = pneg %p40
        %p178 = pneg %p37
        %p179 = pneg %p61
        %p180 = pneg %p58
        %p181 = pneg %p82
        %p182 = pneg %p79
        %p183 = pneg %p108
        %p184 = pneg %p105
        %s185 = sand.u32 %s95, 1
        %s186 = scalar_lea.sflag [#allocation3], %s185
        %s187 = sand.u32 %s95, 1
        %s188 = smul.addr %s187, 8
        %s189 = scalar_lea.vmem [#allocation2], %s188
        %p190 = pneg %p134
        %p191 = pneg %p131
        %p192 = scmp.lt.s32.totalorder %s19, 1
        %s193 = scalar_select %p192, %s19, 1
        %s194 = smul.addr %s193, 2
        %s195 = smul.addr %s194, 8
        %s196 = scalar_lea.vmem %s4, %s195
        %p197 = scmp.lt.s32.totalorder %s19, 1
        %s198 = scalar_select %p197, %s19, 1
        %s199 = smul.addr %s198, 8
        %s200 = scalar_lea.vmem %s0, %s199
        %p201 = scmp.lt.s32.totalorder %s19, 1
        %s202 = scalar_select %p201, %s19, 1
        %s203 = smul.addr %s202, 2
        %s204 = smul.addr %s203, 8
        %s205 = scalar_lea.vmem %s4, %s204
        %v207 = vld [vmem:[%s200] sm:$0xff]
        %v208 = vld [vmem:[%s1] sm:$0x1]
        %v209 = vmul.f32 %v207, %v207
        %vm210 = vcmask 523264
        %v211 = vsel %vm210, %v209, 0.0
        %212 = vadd.xlane.f32.xlu0 %v211
        %v213 = vpop.xlane.xlu0 %212
        %v214 = vrcp.pop 64.0
        %v215 = vmul.f32 64.0, %v214
        %v216 = vsub.f32 1.0, %v215
        %v217 = vmul.f32 %v214, %v216
        %v218 = vadd.f32 %v214, %v217
        %vm219 = vweird.f32 %v214
        %v220 = vsel %vm219, %v214, %v218
        %v221 = vmul.f32 %v213, %v220
        %v222 = vadd.f32 %v221, 1e-05
        %v223 = vrsqrt.pop %v222
        %v224 = vmul.f32 %v223, %v222
        %v225 = vmul.f32 %v224, %v223
        %v226 = vmul.f32 0.5, %v225
        %v227 = vsub.f32 1.5, %v226
        %v228 = vmul.f32 %v223, %v227
        %vm229 = vweird.f32 %v222
        %vm230 = vweird.f32 %v223
        %vm231 = vmor %vm229, %vm230
        %v232 = vsel %vm231, %v223, %v228
        %v233 = vmul.f32 %v207, %v232
        %v235 = vperm.slane %v208, 0
        %v237 = vmul.f32 %v233, %v235
        %238 = vst.msk [vmem:[%s189] sm:$0xff] %vm210, %v237
        %v239 = vpack.c.bf16 %v237, %v237
        %v240 = vld [vmem:[%s2] sm:$0xff]
        %v241 = vld [vmem:[%s2 + $0x8] sm:$0xff]
        %v242 = vld [vmem:[%s2 + $0x10] sm:$0xff]
        %v243 = vld [vmem:[%s2 + $0x18] sm:$0xff]
        %v244 = vld [vmem:[%s2 + $0x20] sm:$0xff]
        %v245 = vld [vmem:[%s2 + $0x28] sm:$0xff]
        %v246 = vld [vmem:[%s2 + $0x30] sm:$0xff]
        %v247 = vld [vmem:[%s2 + $0x38] sm:$0xff]
        %v256 = vunpack.c.l.b16 %v240
        %v257 = vunpack.c.h.b16 %v240
        %v258 = vunpack.c.l.b16 %v241
        %v259 = vunpack.c.h.b16 %v241
        %v260 = vunpack.c.l.b16 %v242
        %v261 = vunpack.c.h.b16 %v242
        %v262 = vunpack.c.l.b16 %v243
        %v263 = vunpack.c.h.b16 %v243
        %v264 = vunpack.c.l.b16 %v244
        %v265 = vunpack.c.h.b16 %v244
        %v266 = vunpack.c.l.b16 %v245
        %v267 = vunpack.c.h.b16 %v245
        %v268 = vunpack.c.l.b16 %v246
        %v269 = vunpack.c.h.b16 %v246
        %v270 = vunpack.c.l.b16 %v247
        %v271 = vunpack.c.h.b16 %v247
        %v272 = vpack.c.b16 %v258, %v256
        %v273 = vpack.c.b16 %v259, %v257
        %v274 = vpack.c.b16 %v262, %v260
        %v275 = vpack.c.b16 %v263, %v261
        %v276 = vpack.c.b16 %v266, %v264
        %v277 = vpack.c.b16 %v267, %v265
        %v278 = vpack.c.b16 %v270, %v268
        %v279 = vpack.c.b16 %v271, %v269
        %v289 = vsel %vm210, %v239, 0
        %291 = vmatpush.bf16.msra.mxu0 0
        %292 = vmatpush.bf16.msra.mxu0 0
        %293 = vmatpush.bf16.msra.mxu0 0
        %294 = vmatpush.bf16.msra.mxu0 0
        %295 = vmatpush.bf16.msra.mxu0 %v278
        %296 = vmatpush.bf16.msra.mxu0 %v276
        %297 = vmatpush.bf16.msra.mxu0 %v274
        %298 = vmatpush.bf16.msra.mxu0 %v272
        %299 = vmatmul.bf16.gmra.mxu0 %v289
        %v300 = vpop.f32.mrf.mxu0
        %v301 = vadd.f32 0.0, %v300
        %v302 = vpop.f32.mrf.mxu0
        %303 = vdwg.mxu0
        %304 = vmatpush.bf16.msra.mxu0 0
        %305 = vmatpush.bf16.msra.mxu0 0
        %306 = vmatpush.bf16.msra.mxu0 0
        %307 = vmatpush.bf16.msra.mxu0 0
        %308 = vmatpush.bf16.msra.mxu0 %v279
        %309 = vmatpush.bf16.msra.mxu0 %v277
        %310 = vmatpush.bf16.msra.mxu0 %v275
        %311 = vmatpush.bf16.msra.mxu0 %v273
        %312 = vmatmul.bf16.gmra.mxu0 %v289
        %v313 = vpop.f32.mrf.mxu0
        %v314 = vadd.f32 0.0, %v313
        %v315 = vpop.f32.mrf.mxu0
        %316 = vdwg.mxu0
        %317 = vst [vmem:[%s205] sm:$0xff] %v301
        %318 = vst [vmem:[%s205 + $0x8] sm:$0xff] %v314
        %s319 = sand.u32 %s95, 1
        %s320 = scalar_lea.sflag [#allocation3], %s319
        %s321 = sand.u32 %s95, 1
        %s322 = smul.addr %s321, 8
        %s323 = scalar_lea.vmem [#allocation2], %s322
        %p324 = scmp.lt.s32.totalorder %s19, 1
        %s325 = scalar_select %p324, %s19, 1
        %s326 = smul.addr %s325, 2
        %s327 = smul.addr %s326, 8
        %s328 = scalar_lea.vmem %s4, %s327
        // Predicated region
        $region33: #{llama_forward.9} parent=31 // pred_check
          %p329 = pneg %p105
        $region34: #{llama_forward.9} parent=31 // pred_check_branch
          %331 = sbr.rel (%p329) target = $region36
        $region35: #{llama_forward.9} parent=31 // pred_region
          %333 = vsyncadd %s320, 0
          %s334 = smul.addr %s19, 8
          %s335 = scalar_lea.hbm %s3, %s334
          %s337 = sshll.u32 %s323, 4
          %s338 = int_to_ptr.vmem [resolvable:$true] %s337
          %s339 = sshll.u32 %s335, 4
          %s340 = int_to_ptr.hbm [resolvable:$true] %s339
          %342 = dma.vmem_to_hbm [thread:$0]  %s338, 128, %s340, %s320
        $region36: #{llama_forward.9} parent=31 // pred_fallthru
          _
        // Predicated region
        $region37: #{llama_forward.9} parent=31 // pred_check
          %p343 = pneg %p131
        $region38: #{llama_forward.9} parent=31 // pred_check_branch
          %345 = sbr.rel (%p343) target = $region40
        $region39: #{llama_forward.9} parent=31 // pred_region
          _
        $region40: #{llama_forward.9} parent=31 // pred_fallthru
          _
      $region32: #{llama_forward.9} parent=5 // pred_fallthru
        _
      %p346 = scmp.le.s32.totalorder 2, %s14
      // Predicated region
      $region41: #{llama_forward.9} parent=5 // pred_check
        %p347 = pneg %p346
      $region42: #{llama_forward.9} parent=5 // pred_check_branch
        %349 = sbr.rel (%p347) target = $region44
      $region43: #{llama_forward.9} parent=5 // pred_region
        %s350 = ssub.s32 %s14, 2
        // Predicated region
        $region45: #{llama_forward.9} parent=43 // pred_check
          %p351 = pneg %p111
        $region46: #{llama_forward.9} parent=43 // pred_check_branch
          %353 = sbr.rel (%p351) target = $region48
        $region47: #{llama_forward.9} parent=43 // pred_region
          %s354 = sand.u32 %s96, 1
          %s355 = scalar_lea.sflag [#allocation3], %s354
          %s356 = sand.u32 %s96, 1
          %s357 = smul.addr %s356, 8
          %s358 = scalar_lea.vmem [#allocation2], %s357
          %360 = dma.done %s355, 128
        $region48: #{llama_forward.9} parent=43 // pred_fallthru
          _
        // Predicated region
        $region49: #{llama_forward.9} parent=43 // pred_check
          %p361 = pneg %p137
        $region50: #{llama_forward.9} parent=43 // pred_check_branch
          %363 = sbr.rel (%p361) target = $region52
        $region51: #{llama_forward.9} parent=43 // pred_region
          %p364 = scmp.lt.s32.totalorder %s20, 1
          %s365 = scalar_select %p364, %s20, 1
          %s366 = smul.addr %s365, 2
          %s367 = smul.addr %s366, 8
          %s368 = scalar_lea.vmem %s4, %s367
        $region52: #{llama_forward.9} parent=43 // pred_fallthru
          _
      $region44: #{llama_forward.9} parent=5 // pred_fallthru
        _
    $region6: #{llama_forward.9} parent=1 // loop_footer
      %s18 = sadd.s32 1, %s14
    $region7: #{llama_forward.9} parent=1 // loop_footer_branch
      %13 = sbr.rel target = $region3
    $region8: #{llama_forward.9} parent=1 // loop_exit
      _
    %369 = vsyncpa [#allocation3], 1
    %s370 = scalar_lea.sflag [#allocation3], 1
    %371 = vsyncpa %s370, 1

// kernel: llama_forward.5
$region0: #{llama_forward.5}
  #allocation0 [shape = 'u32[]', space=smem, size = 0x4, offset = 0x4, fixed_abs, tag = 'smem constant byte address 0x4 - core index']
  #allocation1 [shape = 'u32[72,128]{1,0:T(1,128)}', space=vmem, size = 0x9000, scoped, tag = 'internal scratch']
  %s0 = inlined_call_operand.vmem [shape: f32[2,8,64], index: 0, kind: input, shape index: {}]
  %s1 = inlined_call_operand.vmem [shape: f32[2,1,8], index: 1, kind: input, shape index: {}]
  %s2 = inlined_call_operand.vmem [shape: f32[1,64], index: 2, kind: input, shape index: {}]
  %s3 = inlined_call_operand.vmem [shape: bf16[64,320], index: 3, kind: input, shape index: {}]
  %s4 = inlined_call_operand.vmem [shape: bf16[64,64], index: 4, kind: input, shape index: {}]
  %s5 = inlined_call_operand.vmem [shape: f32[8,64], index: 5, kind: input, shape index: {}]
  %s6 = inlined_call_operand.vmem [shape: f32[8,64], index: 6, kind: input, shape index: {}]
  %s7 = inlined_call_operand.vmem [shape: f32[2,8,64], index: 7, kind: output, shape index: {}]
  %s8 = sld [smem:[#allocation0]]
  $region61: #{llama_forward.5} parent=0
    _
  %s10 = ssub.s32 1, %s8
  %s11 = scalar_select 0, %s10, %s8
  loop: start=0, step=1, limit=4
  $region2: #{llama_forward.5} parent=0 // loop_pre_header
    _
  $region3: #{llama_forward.5} parent=0 // loop_header
    %s13 = sphi 0, %s17
    %p14 = scmp.ge.s32.totalorder %s13, 4
    %s23 = sphi 0, %s25
    %s26 = sphi 0, %s23
    %s27 = sphi 0, %s26
    %s43 = sphi 0, %s27
    %s49 = sphi 0, %s51
    %s52 = sphi 0, %s49
    %s53 = sphi 0, %s52
    %s69 = sphi 0, %s53
    %s73 = sphi 0, %s73
    %s75 = sphi 0, %s73
    %s76 = sphi 0, %s75
    %s90 = sphi 0, %s76
    %s94 = sphi 0, %s94
    %s96 = sphi 0, %s94
    %s97 = sphi 0, %s96
    %s111 = sphi 0, %s97
    %s115 = sphi 0, %s115
    %s117 = sphi 0, %s115
    %s118 = sphi 0, %s117
    %s132 = sphi 0, %s118
    %s136 = sphi 0, %s136
    %s138 = sphi 0, %s136
    %s139 = sphi 0, %s138
    %s153 = sphi 0, %s139
    %s157 = sphi 0, %s157
    %s159 = sphi 0, %s157
    %s160 = sphi 0, %s159
    %s174 = sphi 0, %s160
    %s180 = sphi 0, %s182
    %s183 = sphi 0, %s180
    %s184 = sphi 0, %s183
    %s200 = sphi 0, %s184
  $region4: #{llama_forward.5} parent=0 // loop_header_branch
    %16 = sbr.rel (%p14) target = $region8
  $region5: #{llama_forward.5} parent=0 // loop_body
    %s18 = ssub.s32 %s13, 1
    %s19 = ssub.s32 %s13, 2
    %s20 = sadd.s32 %s13, 1
    %s21 = ssub.s32 %s13, %s20
    %p22 = scmp.eq.s32.totalorder %s21, 0
    %s24 = sadd.s32 %s23, 1
    %s25 = scalar_select %p22, %s23, %s24
    %p28 = pneg %p22
    %p29 = scmp.eq.s32.totalorder %s13, 1
    %p30 = por %p28, %p29
    %p31 = scmp.ne.s32.totalorder %s23, %s26
    %p32 = scmp.eq.s32.totalorder %s13, 0
    %p33 = por %p31, %p32
    %p34 = scmp.ne.s32.totalorder %s23, %s26
    %p35 = scmp.eq.s32.totalorder %s18, 1
    %p36 = por %p34, %p35
    %p37 = scmp.ne.s32.totalorder %s26, %s27
    %p38 = scmp.eq.s32.totalorder %s18, 0
    %p39 = por %p37, %p38
    %p40 = scmp.ne.s32.totalorder %s26, %s27
    %p41 = scmp.eq.s32.totalorder %s19, 1
    %p42 = por %p40, %p41
    %p44 = scmp.ne.s32.totalorder %s27, %s43
    %p45 = scmp.eq.s32.totalorder %s19, 0
    %p46 = por %p44, %p45
    %s47 = ssub.s32 %s13, %s20
    %p48 = scmp.eq.s32.totalorder %s47, 0
    %s50 = sadd.s32 %s49, 1
    %s51 = scalar_select %p48, %s49, %s50
    %p54 = pneg %p48
    %p55 = scmp.eq.s32.totalorder %s13, 1
    %p56 = por %p54, %p55
    %p57 = scmp.ne.s32.totalorder %s49, %s52
    %p58 = scmp.eq.s32.totalorder %s13, 0
    %p59 = por %p57, %p58
    %p60 = scmp.ne.s32.totalorder %s49, %s52
    %p61 = scmp.eq.s32.totalorder %s18, 1
    %p62 = por %p60, %p61
    %p63 = scmp.ne.s32.totalorder %s52, %s53
    %p64 = scmp.eq.s32.totalorder %s18, 0
    %p65 = por %p63, %p64
    %p66 = scmp.ne.s32.totalorder %s52, %s53
    %p67 = scmp.eq.s32.totalorder %s19, 1
    %p68 = por %p66, %p67
    %p70 = scmp.ne.s32.totalorder %s53, %s69
    %p71 = scmp.eq.s32.totalorder %s19, 0
    %p72 = por %p70, %p71
    %s74 = sadd.s32 %s73, 1
    %p77 = scmp.eq.s32.totalorder %s13, 1
    %p78 = scmp.ne.s32.totalorder %s73, %s75
    %p79 = scmp.eq.s32.totalorder %s13, 0
    %p80 = por %p78, %p79
    %p81 = scmp.ne.s32.totalorder %s73, %s75
    %p82 = scmp.eq.s32.totalorder %s18, 1
    %p83 = por %p81, %p82
    %p84 = scmp.ne.s32.totalorder %s75, %s76
    %p85 = scmp.eq.s32.totalorder %s18, 0
    %p86 = por %p84, %p85
    %p87 = scmp.ne.s32.totalorder %s75, %s76
    %p88 = scmp.eq.s32.totalorder %s19, 1
    %p89 = por %p87, %p88
    %p91 = scmp.ne.s32.totalorder %s76, %s90
    %p92 = scmp.eq.s32.totalorder %s19, 0
    %p93 = por %p91, %p92
    %s95 = sadd.s32 %s94, 1
    %p98 = scmp.eq.s32.totalorder %s13, 1
    %p99 = scmp.ne.s32.totalorder %s94, %s96
    %p100 = scmp.eq.s32.totalorder %s13, 0
    %p101 = por %p99, %p100
    %p102 = scmp.ne.s32.totalorder %s94, %s96
    %p103 = scmp.eq.s32.totalorder %s18, 1
    %p104 = por %p102, %p103
    %p105 = scmp.ne.s32.totalorder %s96, %s97
    %p106 = scmp.eq.s32.totalorder %s18, 0
    %p107 = por %p105, %p106
    %p108 = scmp.ne.s32.totalorder %s96, %s97
    %p109 = scmp.eq.s32.totalorder %s19, 1
    %p110 = por %p108, %p109
    %p112 = scmp.ne.s32.totalorder %s97, %s111
    %p113 = scmp.eq.s32.totalorder %s19, 0
    %p114 = por %p112, %p113
    %s116 = sadd.s32 %s115, 1
    %p119 = scmp.eq.s32.totalorder %s13, 1
    %p120 = scmp.ne.s32.totalorder %s115, %s117
    %p121 = scmp.eq.s32.totalorder %s13, 0
    %p122 = por %p120, %p121
    %p123 = scmp.ne.s32.totalorder %s115, %s117
    %p124 = scmp.eq.s32.totalorder %s18, 1
    %p125 = por %p123, %p124
    %p126 = scmp.ne.s32.totalorder %s117, %s118
    %p127 = scmp.eq.s32.totalorder %s18, 0
    %p128 = por %p126, %p127
    %p129 = scmp.ne.s32.totalorder %s117, %s118
    %p130 = scmp.eq.s32.totalorder %s19, 1
    %p131 = por %p129, %p130
    %p133 = scmp.ne.s32.totalorder %s118, %s132
    %p134 = scmp.eq.s32.totalorder %s19, 0
    %p135 = por %p133, %p134
    %s137 = sadd.s32 %s136, 1
    %p140 = scmp.eq.s32.totalorder %s13, 1
    %p141 = scmp.ne.s32.totalorder %s136, %s138
    %p142 = scmp.eq.s32.totalorder %s13, 0
    %p143 = por %p141, %p142
    %p144 = scmp.ne.s32.totalorder %s136, %s138
    %p145 = scmp.eq.s32.totalorder %s18, 1
    %p146 = por %p144, %p145
    %p147 = scmp.ne.s32.totalorder %s138, %s139
    %p148 = scmp.eq.s32.totalorder %s18, 0
    %p149 = por %p147, %p148
    %p150 = scmp.ne.s32.totalorder %s138, %s139
    %p151 = scmp.eq.s32.totalorder %s19, 1
    %p152 = por %p150, %p151
    %p154 = scmp.ne.s32.totalorder %s139, %s153
    %p155 = scmp.eq.s32.totalorder %s19, 0
    %p156 = por %p154, %p155
    %s158 = sadd.s32 %s157, 1
    %p161 = scmp.eq.s32.totalorder %s13, 1
    %p162 = scmp.ne.s32.totalorder %s157, %s159
    %p163 = scmp.eq.s32.totalorder %s13, 0
    %p164 = por %p162, %p163
    %p165 = scmp.ne.s32.totalorder %s157, %s159
    %p166 = scmp.eq.s32.totalorder %s18, 1
    %p167 = por %p165, %p166
    %p168 = scmp.ne.s32.totalorder %s159, %s160
    %p169 = scmp.eq.s32.totalorder %s18, 0
    %p170 = por %p168, %p169
    %p171 = scmp.ne.s32.totalorder %s159, %s160
    %p172 = scmp.eq.s32.totalorder %s19, 1
    %p173 = por %p171, %p172
    %p175 = scmp.ne.s32.totalorder %s160, %s174
    %p176 = scmp.eq.s32.totalorder %s19, 0
    %p177 = por %p175, %p176
    %s178 = ssub.s32 %s13, %s20
    %p179 = scmp.eq.s32.totalorder %s178, 0
    %s181 = sadd.s32 %s180, 1
    %s182 = scalar_select %p179, %s180, %s181
    %p185 = pneg %p179
    %p186 = scmp.eq.s32.totalorder %s13, 1
    %p187 = por %p185, %p186
    %p188 = scmp.ne.s32.totalorder %s180, %s183
    %p189 = scmp.eq.s32.totalorder %s13, 0
    %p190 = por %p188, %p189
    %p191 = scmp.ne.s32.totalorder %s180, %s183
    %p192 = scmp.eq.s32.totalorder %s18, 1
    %p193 = por %p191, %p192
    %p194 = scmp.ne.s32.totalorder %s183, %s184
    %p195 = scmp.eq.s32.totalorder %s18, 0
    %p196 = por %p194, %p195
    %p197 = scmp.ne.s32.totalorder %s183, %s184
    %p198 = scmp.eq.s32.totalorder %s19, 1
    %p199 = por %p197, %p198
    %p201 = scmp.ne.s32.totalorder %s184, %s200
    %p202 = scmp.eq.s32.totalorder %s19, 0
    %p203 = por %p201, %p202
    %p204 = scmp.le.s32.totalorder 1, %s13
    %p205 = scmp.lt.s32.totalorder %s13, 3
    %p206 = pnand %p204, %p205
    %p207 = pneg %p206
    // Predicated region
    $region9: #{llama_forward.5} parent=5 // pred_check
      _
    $region10: #{llama_forward.5} parent=5 // pred_check_branch
      %209 = sbr.rel (%p206) target = $region12
    $region11: #{llama_forward.5} parent=5 // pred_region
      %s210 = ssub.s32 %s13, 1
      // Predicated region
      $region13: #{llama_forward.5} parent=11 // pred_check
        %p211 = pneg %p86
      $region14: #{llama_forward.5} parent=11 // pred_check_branch
        %213 = sbr.rel (%p211) target = $region16
      $region15: #{llama_forward.5} parent=11 // pred_region
        _
      $region16: #{llama_forward.5} parent=11 // pred_fallthru
        _
      // Predicated region
      $region17: #{llama_forward.5} parent=11 // pred_check
        %p214 = pneg %p107
      $region18: #{llama_forward.5} parent=11 // pred_check_branch
        %216 = sbr.rel (%p214) target = $region20
      $region19: #{llama_forward.5} parent=11 // pred_region
        _
      $region20: #{llama_forward.5} parent=11 // pred_fallthru
        _
      // Predicated region
      $region21: #{llama_forward.5} parent=11 // pred_check
        %p217 = pneg %p128
      $region22: #{llama_forward.5} parent=11 // pred_check_branch
        %219 = sbr.rel (%p217) target = $region24
      $region23: #{llama_forward.5} parent=11 // pred_region
        _
      $region24: #{llama_forward.5} parent=11 // pred_fallthru
        _
      // Predicated region
      $region25: #{llama_forward.5} parent=11 // pred_check
        %p220 = pneg %p149
      $region26: #{llama_forward.5} parent=11 // pred_check_branch
        %222 = sbr.rel (%p220) target = $region28
      $region27: #{llama_forward.5} parent=11 // pred_region
        _
      $region28: #{llama_forward.5} parent=11 // pred_fallthru
        _
      // Predicated region
      $region29: #{llama_forward.5} parent=11 // pred_check
        %p223 = pneg %p170
      $region30: #{llama_forward.5} parent=11 // pred_check_branch
        %225 = sbr.rel (%p223) target = $region32
      $region31: #{llama_forward.5} parent=11 // pred_region
        _
      $region32: #{llama_forward.5} parent=11 // pred_fallthru
        _
    $region12: #{llama_forward.5} parent=5 // pred_fallthru
      _
    %p226 = scmp.lt.s32.totalorder %s13, 2
    // Predicated region
    $region33: #{llama_forward.5} parent=5 // pred_check
      %p227 = pneg %p226
    $region34: #{llama_forward.5} parent=5 // pred_check_branch
      %229 = sbr.rel (%p227) target = $region36
    $region35: #{llama_forward.5} parent=5 // pred_region
      // Predicated region
      $region37: #{llama_forward.5} parent=35 // pred_check
        %p230 = pneg %p33
      $region38: #{llama_forward.5} parent=35 // pred_check_branch
        %232 = sbr.rel (%p230) target = $region40
      $region39: #{llama_forward.5} parent=35 // pred_region
        %p233 = scmp.lt.s32.totalorder %s13, 1
        %s234 = scalar_select %p233, %s13, 1
        %s235 = smul.addr %s234, 8
        %s236 = scalar_lea.vmem %s0, %s235
      $region40: #{llama_forward.5} parent=35 // pred_fallthru
        _
      // Predicated region
      $region41: #{llama_forward.5} parent=35 // pred_check
        %p237 = pneg %p59
      $region42: #{llama_forward.5} parent=35 // pred_check_branch
        %239 = sbr.rel (%p237) target = $region44
      $region43: #{llama_forward.5} parent=35 // pred_region
        %p240 = scmp.lt.s32.totalorder %s13, 1
        %s241 = scalar_select %p240, %s13, 1
        %s242 = scalar_lea.vmem %s1, %s241
      $region44: #{llama_forward.5} parent=35 // pred_fallthru
        _
    $region36: #{llama_forward.5} parent=5 // pred_fallthru
      _
    %p243 = scmp.le.s32.totalorder 1, %s13
    %p244 = scmp.lt.s32.totalorder %s13, 3
    %p245 = pnand %p243, %p244
    %p246 = pneg %p245
    // Predicated region
    $region45: #{llama_forward.5} parent=5 // pred_check
      _
    $region46: #{llama_forward.5} parent=5 // pred_check_branch
      %248 = sbr.rel (%p245) target = $region48
    $region47: #{llama_forward.5} parent=5 // pred_region
      %s249 = ssub.s32 %s13, 1
      %p250 = scmp.lt.s32.totalorder %s18, 1
      %s251 = scalar_select %p250, %s18, 1
      %s252 = smul.addr %s251, 8
      %s253 = scalar_lea.vmem %s0, %s252
      %p254 = pneg %p39
      %p255 = pneg %p36
      %p256 = scmp.lt.s32.totalorder %s18, 1
      %s257 = scalar_select %p256, %s18, 1
      %s258 = scalar_lea.vmem %s1, %s257
      %p259 = pneg %p65
      %p260 = pneg %p62
      %p261 = pneg %p86
      %p262 = pneg %p83
      %p263 = pneg %p107
      %p264 = pneg %p104
      %p265 = pneg %p128
      %p266 = pneg %p125
      %p267 = pneg %p149
      %p268 = pneg %p146
      %p269 = pneg %p170
      %p270 = pneg %p167
      %p271 = pneg %p196
      %p272 = pneg %p193
      %p273 = scmp.lt.s32.totalorder %s18, 1
      %s274 = scalar_select %p273, %s18, 1
      %s275 = smul.addr %s274, 8
      %s276 = scalar_lea.vmem %s7, %s275
      %p277 = scmp.lt.s32.totalorder %s18, 1
      %s278 = scalar_select %p277, %s18, 1
      %s279 = smul.addr %s278, 8
      %s280 = scalar_lea.vmem %s0, %s279
      %p281 = scmp.lt.s32.totalorder %s18, 1
      %s282 = scalar_select %p281, %s18, 1
      %s283 = scalar_lea.vmem %s1, %s282
      %p284 = scmp.lt.s32.totalorder %s18, 1
      %s285 = scalar_select %p284, %s18, 1
      %s286 = smul.addr %s285, 8
      %s287 = scalar_lea.vmem %s7, %s286
      %v289 = vld [vmem:[%s280] sm:$0xff]
      %v290 = vld [vmem:[%s2] sm:$0x1]
      %v291 = vmul.f32 %v289, %v289
      %vm292 = vcmask 523264
      %v293 = vsel %vm292, %v291, 0.0
      %294 = vadd.xlane.f32.xlu0 %v293
      %v295 = vpop.xlane.xlu0 %294
      %v296 = vrcp.pop 64.0
      %v297 = vmul.f32 64.0, %v296
      %v298 = vsub.f32 1.0, %v297
      %v299 = vmul.f32 %v296, %v298
      %v300 = vadd.f32 %v296, %v299
      %vm301 = vweird.f32 %v296
      %v302 = vsel %vm301, %v296, %v300
      %v303 = vmul.f32 %v295, %v302
      %v304 = vadd.f32 %v303, 1e-05
      %v305 = vrsqrt.pop %v304
      %v306 = vmul.f32 %v305, %v304
      %v307 = vmul.f32 %v306, %v305
      %v308 = vmul.f32 0.5, %v307
      %v309 = vsub.f32 1.5, %v308
      %v310 = vmul.f32 %v305, %v309
      %vm311 = vweird.f32 %v304
      %vm312 = vweird.f32 %v305
      %vm313 = vmor %vm311, %vm312
      %v314 = vsel %vm313, %v305, %v310
      %v315 = vmul.f32 %v289, %v314
      %v317 = vperm.slane %v290, 0
      %v319 = vmul.f32 %v315, %v317
      %v320 = vpack.c.bf16 %v319, %v319
      %v321 = vld [vmem:[%s3] sm:$0xff]
      %v322 = vld [vmem:[%s3 + $0x8] sm:$0xf]
      %v323 = vld [vmem:[%s3 + $0xc] sm:$0xff]
      %v324 = vld [vmem:[%s3 + $0x14] sm:$0xf]
      %v325 = vld [vmem:[%s3 + $0x18] sm:$0xff]
      %v326 = vld [vmem:[%s3 + $0x20] sm:$0xf]
      %v327 = vld [vmem:[%s3 + $0x24] sm:$0xff]
      %v328 = vld [vmem:[%s3 + $0x2c] sm:$0xf]
      %v329 = vld [vmem:[%s3 + $0x30] sm:$0xff]
      %v330 = vld [vmem:[%s3 + $0x38] sm:$0xf]
      %v331 = vld [vmem:[%s3 + $0x3c] sm:$0xff]
      %v332 = vld [vmem:[%s3 + $0x44] sm:$0xf]
      %v333 = vld [vmem:[%s3 + $0x48] sm:$0xff]
      %v334 = vld [vmem:[%s3 + $0x50] sm:$0xf]
      %v335 = vld [vmem:[%s3 + $0x54] sm:$0xff]
      %v336 = vld [vmem:[%s3 + $0x5c] sm:$0xf]
      %v353 = vunpack.c.l.b16 %v321
      %v354 = vunpack.c.h.b16 %v321
      %v355 = vunpack.c.l.b16 %v322
      %v356 = vunpack.c.l.b16 %v323
      %v357 = vunpack.c.h.b16 %v323
      %v358 = vunpack.c.l.b16 %v324
      %v359 = vunpack.c.l.b16 %v325
      %v360 = vunpack.c.h.b16 %v325
      %v361 = vunpack.c.l.b16 %v326
      %v362 = vunpack.c.l.b16 %v327
      %v363 = vunpack.c.h.b16 %v327
      %v364 = vunpack.c.l.b16 %v328
      %v365 = vunpack.c.l.b16 %v329
      %v366 = vunpack.c.h.b16 %v329
      %v367 = vunpack.c.l.b16 %v330
      %v368 = vunpack.c.l.b16 %v331
      %v369 = vunpack.c.h.b16 %v331
      %v370 = vunpack.c.l.b16 %v332
      %v371 = vunpack.c.l.b16 %v333
      %v372 = vunpack.c.h.b16 %v333
      %v373 = vunpack.c.l.b16 %v334
      %v374 = vunpack.c.l.b16 %v335
      %v375 = vunpack.c.h.b16 %v335
      %v376 = vunpack.c.l.b16 %v336
      %v377 = vpack.c.b16 %v356, %v353
      %v378 = vpack.c.b16 %v357, %v354
      %v379 = vpack.c.b16 %v358, %v355
      %v380 = vpack.c.b16 %v362, %v359
      %v381 = vpack.c.b16 %v363, %v360
      %v382 = vpack.c.b16 %v364, %v361
      %v383 = vpack.c.b16 %v368, %v365
      %v384 = vpack.c.b16 %v369, %v366
      %v385 = vpack.c.b16 %v370, %v367
      %v386 = vpack.c.b16 %v374, %v371
      %v387 = vpack.c.b16 %v375, %v372
      %v388 = vpack.c.b16 %v376, %v373
      %v402 = vsel %vm292, %v320, 0
      %404 = vmatpush.bf16.msra.mxu0 0
      %405 = vmatpush.bf16.msra.mxu0 0
      %406 = vmatpush.bf16.msra.mxu0 0
      %407 = vmatpush.bf16.msra.mxu0 0
      %408 = vmatpush.bf16.msra.mxu0 %v386
      %409 = vmatpush.bf16.msra.mxu0 %v383
      %410 = vmatpush.bf16.msra.mxu0 %v380
      %411 = vmatpush.bf16.msra.mxu0 %v377
      %412 = vmatmul.bf16.gmra.mxu0 %v402
      %v413 = vpop.f32.mrf.mxu0
      %v414 = vadd.f32 0.0, %v413
      %v415 = vpop.f32.mrf.mxu0
      %416 = vdwg.mxu0
      %417 = vmatpush.bf16.msra.mxu0 0
      %418 = vmatpush.bf16.msra.mxu0 0
      %419 = vmatpush.bf16.msra.mxu0 0
      %420 = vmatpush.bf16.msra.mxu0 0
      %421 = vmatpush.bf16.msra.mxu0 %v387
      %422 = vmatpush.bf16.msra.mxu0 %v384
      %423 = vmatpush.bf16.msra.mxu0 %v381
      %424 = vmatpush.bf16.msra.mxu0 %v378
      %425 = vmatmul.bf16.gmra.mxu0 %v402
      %v426 = vpop.f32.mrf.mxu0
      %v427 = vadd.f32 0.0, %v426
      %v428 = vpop.f32.mrf.mxu0
      %429 = vdwg.mxu0
      %430 = vmatpush.bf16.msra.mxu0 0
      %431 = vmatpush.bf16.msra.mxu0 0
      %432 = vmatpush.bf16.msra.mxu0 0
      %433 = vmatpush.bf16.msra.mxu0 0
      %434 = vmatpush.bf16.msra.mxu0 %v388
      %435 = vmatpush.bf16.msra.mxu0 %v385
      %436 = vmatpush.bf16.msra.mxu0 %v382
      %437 = vmatpush.bf16.msra.mxu0 %v379
      %438 = vmatmul.bf16.gmra.mxu0 %v402
      %v439 = vpop.f32.mrf.mxu0
      %v440 = vadd.f32 0.0, %v439
      %v441 = vpop.f32.mrf.mxu0
      %442 = vdwg.mxu0
      %v443 = vld [vmem:[%s5] sm:$0xff]
      %v444 = vld [vmem:[%s6] sm:$0xff]
      %v445 = vmul.f32 %v414, %v443
      %447 = vrot.lane.b32.xlu0 %v444, 64
      %v448 = vpop.permute.xlu0 %447
      %v450 = vmul.f32 %v427, %v448
      %452 = vrot.lane.b32.xlu0 %v450, 64
      %v453 = vpop.permute.xlu0 %452
      %v455 = vadd.f32 %v445, %v453
      %457 = vrot.lane.b32.xlu0 %v443, 64
      %v458 = vpop.permute.xlu0 %457
      %v460 = vmul.f32 %v414, %v458
      %v461 = vmul.f32 %v440, %v444
      %463 = vrot.lane.b32.xlu0 %v461, 64
      %v464 = vpop.permute.xlu0 %463
      %v466 = vadd.f32 %v460, %v464
      %v467 = vlaneseq
      %v468 = vshrl.u32 %v467, 7
      %v469 = vlaneseq
      %v470 = vand.u32 %v469, 127
      %vm471 = vcmp.le.s32.totalorder %v470, %v468
      %v472 = vld [vmem:[%s283] sm:$0x1]
      %vm473 = vcmp.gt.f32.partialorder %v472, 0.0
      %v474 = vsel %vm473, 1, 0
      %v475 = vperm.slane %v474, 0
      %vm476 = vcmp.eq.s32.totalorder %v475, 1
      %vm477 = vmand %vm471, %vm476
      %v478 = vpack.c.bf16 %v455, %v455
      %v479 = vpack.c.bf16 %v466, %v466
      %v480 = vpack.c.bf16 %v427, %v427
      %482 = vrot.lane.b32.xlu0 %v479, 64
      %v483 = vpop.permute.xlu0 %482
      %vm484 = vcmask 130048
      %v486 = vsel %vm484, %v478, 0
      %v489 = vsel %vm484, %v483, 0
      %491 = vmatpush.bf16.xpose.msra.mxu0 0
      %492 = vmatpush.bf16.xpose.msra.mxu0 0
      %493 = vmatpush.bf16.xpose.msra.mxu0 0
      %494 = vmatpush.bf16.xpose.msra.mxu0 0
      %495 = vmatpush.bf16.xpose.msra.mxu0 0
      %496 = vmatpush.bf16.xpose.msra.mxu0 0
      %497 = vmatpush.bf16.xpose.msra.mxu0 0
      %498 = vmatpush.bf16.xpose.msra.mxu0 %v489
      %499 = vmatmul.bf16.gmra.mxu0 %v486
      %v500 = vpop.f32.mrf.mxu0
      %v501 = vadd.f32 0.0, %v500
      %v502 = vpop.f32.mrf.mxu0
      %503 = vdwg.mxu0
      %v504 = vmul.f32 %v501, 0.25
      %v505 = vsel %vm477, %v504, -1e+30
      %vm506 = vcmask 64512
      %v507 = vsel %vm506, %v505, -inf
      %508 = vmax.xlane.f32.xlu0 %v507
      %v509 = vpop.xlane.xlu0 %508
      %v510 = vsub.f32 %v505, %v509
      %v511 = vmul.f32 %v510, 1.442695
      %v512 = vpow.pop %v511
      %v513 = vsel %vm477, %v512, 0.0
      %v514 = vsel %vm506, %v513, 0.0
      %515 = vadd.xlane.f32.xlu0 %v514
      %v516 = vpop.xlane.xlu0 %515
      %vm517 = vcmp.gt.f32.partialorder %v516, 0.0
      %v518 = vsel %vm517, %v516, 1.0
      %v519 = vrcp.pop %v518
      %v520 = vpack.c.bf16 %v513, %v513
      %v522 = vsel %vm506, %v520, 0
      %vm524 = vcmask 1043456
      %v526 = vsel %vm524, %v480, 0
      %528 = vmatpush.bf16.msra.mxu0 0
      %529 = vmatpush.bf16.msra.mxu0 0
      %530 = vmatpush.bf16.msra.mxu0 0
      %531 = vmatpush.bf16.msra.mxu0 0
      %532 = vmatpush.bf16.msra.mxu0 0
      %533 = vmatpush.bf16.msra.mxu0 0
      %534 = vmatpush.bf16.msra.mxu0 0
      %535 = vmatpush.bf16.msra.mxu0 %v526
      %536 = vmatmul.bf16.gmra.mxu0 %v522
      %v537 = vpop.f32.mrf.mxu0
      %v538 = vadd.f32 0.0, %v537
      %v539 = vpop.f32.mrf.mxu0
      %540 = vdwg.mxu0
      %v541 = vmul.f32 %v538, %v519
      %543 = vrot.lane.b32.xlu0 %v478, 112
      %v544 = vpop.permute.xlu0 %543
      %545 = vrot.lane.b32.xlu0 %v479, 48
      %v546 = vpop.permute.xlu0 %545
      %v548 = vsel %vm484, %v544, 0
      %v551 = vsel %vm484, %v546, 0
      %553 = vmatpush.bf16.xpose.msra.mxu0 0
      %554 = vmatpush.bf16.xpose.msra.mxu0 0
      %555 = vmatpush.bf16.xpose.msra.mxu0 0
      %556 = vmatpush.bf16.xpose.msra.mxu0 0
      %557 = vmatpush.bf16.xpose.msra.mxu0 0
      %558 = vmatpush.bf16.xpose.msra.mxu0 0
      %559 = vmatpush.bf16.xpose.msra.mxu0 0
      %560 = vmatpush.bf16.xpose.msra.mxu0 %v551
      %561 = vmatmul.bf16.gmra.mxu0 %v548
      %v562 = vpop.f32.mrf.mxu0
      %v563 = vadd.f32 0.0, %v562
      %v564 = vpop.f32.mrf.mxu0
      %565 = vdwg.mxu0
      %v566 = vmul.f32 %v563, 0.25
      %v567 = vsel %vm477, %v566, -1e+30
      %v568 = vsel %vm506, %v567, -inf
      %569 = vmax.xlane.f32.xlu0 %v568
      %v570 = vpop.xlane.xlu0 %569
      %v571 = vsub.f32 %v567, %v570
      %v572 = vmul.f32 %v571, 1.442695
      %v573 = vpow.pop %v572
      %v574 = vsel %vm477, %v573, 0.0
      %v575 = vsel %vm506, %v574, 0.0
      %576 = vadd.xlane.f32.xlu0 %v575
      %v577 = vpop.xlane.xlu0 %576
      %vm578 = vcmp.gt.f32.partialorder %v577, 0.0
      %v579 = vsel %vm578, %v577, 1.0
      %v580 = vrcp.pop %v579
      %v581 = vpack.c.bf16 %v574, %v574
      %583 = vrot.lane.b32.xlu0 %v480, 112
      %v584 = vpop.permute.xlu0 %583
      %v586 = vsel %vm506, %v581, 0
      %v589 = vsel %vm524, %v584, 0
      %591 = vmatpush.bf16.msra.mxu0 0
      %592 = vmatpush.bf16.msra.mxu0 0
      %593 = vmatpush.bf16.msra.mxu0 0
      %594 = vmatpush.bf16.msra.mxu0 0
      %595 = vmatpush.bf16.msra.mxu0 0
      %596 = vmatpush.bf16.msra.mxu0 0
      %597 = vmatpush.bf16.msra.mxu0 0
      %598 = vmatpush.bf16.msra.mxu0 %v589
      %599 = vmatmul.bf16.gmra.mxu0 %v586
      %v600 = vpop.f32.mrf.mxu0
      %v601 = vadd.f32 0.0, %v600
      %v602 = vpop.f32.mrf.mxu0
      %603 = vdwg.mxu0
      %v604 = vmul.f32 %v601, %v580
      %605 = vrot.lane.b32.xlu0 %v478, 96
      %v606 = vpop.permute.xlu0 %605
      %607 = vrot.lane.b32.xlu0 %v479, 32
      %v608 = vpop.permute.xlu0 %607
      %v610 = vsel %vm484, %v606, 0
      %v613 = vsel %vm484, %v608, 0
      %615 = vmatpush.bf16.xpose.msra.mxu0 0
      %616 = vmatpush.bf16.xpose.msra.mxu0 0
      %617 = vmatpush.bf16.xpose.msra.mxu0 0
      %618 = vmatpush.bf16.xpose.msra.mxu0 0
      %619 = vmatpush.bf16.xpose.msra.mxu0 0
      %620 = vmatpush.bf16.xpose.msra.mxu0 0
      %621 = vmatpush.bf16.xpose.msra.mxu0 0
      %622 = vmatpush.bf16.xpose.msra.mxu0 %v613
      %623 = vmatmul.bf16.gmra.mxu0 %v610
      %v624 = vpop.f32.mrf.mxu0
      %v625 = vadd.f32 0.0, %v624
      %v626 = vpop.f32.mrf.mxu0
      %627 = vdwg.mxu0
      %v628 = vmul.f32 %v625, 0.25
      %v629 = vsel %vm477, %v628, -1e+30
      %v630 = vsel %vm506, %v629, -inf
      %631 = vmax.xlane.f32.xlu0 %v630
      %v632 = vpop.xlane.xlu0 %631
      %v633 = vsub.f32 %v629, %v632
      %v634 = vmul.f32 %v633, 1.442695
      %v635 = vpow.pop %v634
      %v636 = vsel %vm477, %v635, 0.0
      %v637 = vsel %vm506, %v636, 0.0
      %638 = vadd.xlane.f32.xlu0 %v637
      %v639 = vpop.xlane.xlu0 %638
      %vm640 = vcmp.gt.f32.partialorder %v639, 0.0
      %v641 = vsel %vm640, %v639, 1.0
      %v642 = vrcp.pop %v641
      %v643 = vpack.c.bf16 %v636, %v636
      %644 = vrot.lane.b32.xlu0 %v480, 96
      %v645 = vpop.permute.xlu0 %644
      %v647 = vsel %vm506, %v643, 0
      %v650 = vsel %vm524, %v645, 0
      %652 = vmatpush.bf16.msra.mxu0 0
      %653 = vmatpush.bf16.msra.mxu0 0
      %654 = vmatpush.bf16.msra.mxu0 0
      %655 = vmatpush.bf16.msra.mxu0 0
      %656 = vmatpush.bf16.msra.mxu0 0
      %657 = vmatpush.bf16.msra.mxu0 0
      %658 = vmatpush.bf16.msra.mxu0 0
      %659 = vmatpush.bf16.msra.mxu0 %v650
      %660 = vmatmul.bf16.gmra.mxu0 %v647
      %v661 = vpop.f32.mrf.mxu0
      %v662 = vadd.f32 0.0, %v661
      %v663 = vpop.f32.mrf.mxu0
      %664 = vdwg.mxu0
      %v665 = vmul.f32 %v662, %v642
      %666 = vrot.lane.b32.xlu0 %v478, 80
      %v667 = vpop.permute.xlu0 %666
      %668 = vrot.lane.b32.xlu0 %v479, 16
      %v669 = vpop.permute.xlu0 %668
      %v671 = vsel %vm484, %v667, 0
      %v674 = vsel %vm484, %v669, 0
      %676 = vmatpush.bf16.xpose.msra.mxu0 0
      %677 = vmatpush.bf16.xpose.msra.mxu0 0
      %678 = vmatpush.bf16.xpose.msra.mxu0 0
      %679 = vmatpush.bf16.xpose.msra.mxu0 0
      %680 = vmatpush.bf16.xpose.msra.mxu0 0
      %681 = vmatpush.bf16.xpose.msra.mxu0 0
      %682 = vmatpush.bf16.xpose.msra.mxu0 0
      %683 = vmatpush.bf16.xpose.msra.mxu0 %v674
      %684 = vmatmul.bf16.gmra.mxu0 %v671
      %v685 = vpop.f32.mrf.mxu0
      %v686 = vadd.f32 0.0, %v685
      %v687 = vpop.f32.mrf.mxu0
      %688 = vdwg.mxu0
      %v689 = vmul.f32 %v686, 0.25
      %v690 = vsel %vm477, %v689, -1e+30
      %v691 = vsel %vm506, %v690, -inf
      %692 = vmax.xlane.f32.xlu0 %v691
      %v693 = vpop.xlane.xlu0 %692
      %v694 = vsub.f32 %v690, %v693
      %v695 = vmul.f32 %v694, 1.442695
      %v696 = vpow.pop %v695
      %v697 = vsel %vm477, %v696, 0.0
      %v698 = vsel %vm506, %v697, 0.0
      %699 = vadd.xlane.f32.xlu0 %v698
      %v700 = vpop.xlane.xlu0 %699
      %vm701 = vcmp.gt.f32.partialorder %v700, 0.0
      %v702 = vsel %vm701, %v700, 1.0
      %v703 = vrcp.pop %v702
      %v704 = vpack.c.bf16 %v697, %v697
      %705 = vrot.lane.b32.xlu0 %v480, 80
      %v706 = vpop.permute.xlu0 %705
      %v708 = vsel %vm506, %v704, 0
      %v711 = vsel %vm524, %v706, 0
      %713 = vmatpush.bf16.msra.mxu0 0
      %714 = vmatpush.bf16.msra.mxu0 0
      %715 = vmatpush.bf16.msra.mxu0 0
      %716 = vmatpush.bf16.msra.mxu0 0
      %717 = vmatpush.bf16.msra.mxu0 0
      %718 = vmatpush.bf16.msra.mxu0 0
      %719 = vmatpush.bf16.msra.mxu0 0
      %720 = vmatpush.bf16.msra.mxu0 %v711
      %721 = vmatmul.bf16.gmra.mxu0 %v708
      %v722 = vpop.f32.mrf.mxu0
      %v723 = vadd.f32 0.0, %v722
      %v724 = vpop.f32.mrf.mxu0
      %725 = vdwg.mxu0
      %v726 = vmul.f32 %v723, %v703
      %728 = vrot.lane.b32.xlu0 %v604, 16
      %v729 = vpop.permute.xlu0 %728
      %732 = vrot.lane.b32.xlu0 %v665, 32
      %v733 = vpop.permute.xlu0 %732
      %736 = vrot.lane.b32.xlu0 %v726, 48
      %v737 = vpop.permute.xlu0 %736
      %v739 = vsel %vm484, %v541, %v729
      %vm740 = vcmask 261120
      %v741 = vsel %vm740, %v739, %v733
      %vm742 = vcmask 392192
      %v743 = vsel %vm742, %v741, %v737
      %v744 = vpack.c.bf16 %v743, %v743
      %v745 = vld [vmem:[%s4] sm:$0xf]
      %v746 = vld [vmem:[%s4 + $0x4] sm:$0xf]
      %v747 = vld [vmem:[%s4 + $0x8] sm:$0xf]
      %v748 = vld [vmem:[%s4 + $0xc] sm:$0xf]
      %v749 = vld [vmem:[%s4 + $0x10] sm:$0xf]
      %v750 = vld [vmem:[%s4 + $0x14] sm:$0xf]
      %v751 = vld [vmem:[%s4 + $0x18] sm:$0xf]
      %v752 = vld [vmem:[%s4 + $0x1c] sm:$0xf]
      %v761 = vunpack.c.l.b16 %v745
      %v762 = vunpack.c.l.b16 %v746
      %v763 = vunpack.c.l.b16 %v747
      %v764 = vunpack.c.l.b16 %v748
      %v765 = vunpack.c.l.b16 %v749
      %v766 = vunpack.c.l.b16 %v750
      %v767 = vunpack.c.l.b16 %v751
      %v768 = vunpack.c.l.b16 %v752
      %v769 = vpack.c.b16 %v762, %v761
      %v770 = vpack.c.b16 %v764, %v763
      %v771 = vpack.c.b16 %v766, %v765
      %v772 = vpack.c.b16 %v768, %v767
      %v778 = vsel %vm292, %v744, 0
      %780 = vmatpush.bf16.msra.mxu0 0
      %781 = vmatpush.bf16.msra.mxu0 0
      %782 = vmatpush.bf16.msra.mxu0 0
      %783 = vmatpush.bf16.msra.mxu0 0
      %784 = vmatpush.bf16.msra.mxu0 %v772
      %785 = vmatpush.bf16.msra.mxu0 %v771
      %786 = vmatpush.bf16.msra.mxu0 %v770
      %787 = vmatpush.bf16.msra.mxu0 %v769
      %788 = vmatmul.bf16.gmra.mxu0 %v778
      %v789 = vpop.f32.mrf.mxu0
      %v790 = vadd.f32 0.0, %v789
      %v791 = vpop.f32.mrf.mxu0
      %792 = vdwg.mxu0
      %v793 = vadd.f32 %v289, %v790
      %794 = vst.msk [vmem:[%s287] sm:$0xff] %vm292, %v793
      %p795 = scmp.lt.s32.totalorder %s18, 1
      %s796 = scalar_select %p795, %s18, 1
      %s797 = smul.addr %s796, 8
      %s798 = scalar_lea.vmem %s7, %s797
      // Predicated region
      $region49: #{llama_forward.5} parent=47 // pred_check
        %p799 = pneg %p193
      $region50: #{llama_forward.5} parent=47 // pred_check_branch
        %801 = sbr.rel (%p799) target = $region52
      $region51: #{llama_forward.5} parent=47 // pred_region
        _
      $region52: #{llama_forward.5} parent=47 // pred_fallthru
        _
    $region48: #{llama_forward.5} parent=5 // pred_fallthru
      _
    %p802 = scmp.le.s32.totalorder 2, %s13
    // Predicated region
    $region53: #{llama_forward.5} parent=5 // pred_check
      %p803 = pneg %p802
    $region54: #{llama_forward.5} parent=5 // pred_check_branch
      %805 = sbr.rel (%p803) target = $region56
    $region55: #{llama_forward.5} parent=5 // pred_region
      %s806 = ssub.s32 %s13, 2
      // Predicated region
      $region57: #{llama_forward.5} parent=55 // pred_check
        %p807 = pneg %p199
      $region58: #{llama_forward.5} parent=55 // pred_check_branch
        %809 = sbr.rel (%p807) target = $region60
      $region59: #{llama_forward.5} parent=55 // pred_region
        %p810 = scmp.lt.s32.totalorder %s19, 1
        %s811 = scalar_select %p810, %s19, 1
        %s812 = smul.addr %s811, 8
        %s813 = scalar_lea.vmem %s7, %s812
      $region60: #{llama_forward.5} parent=55 // pred_fallthru
        _
    $region56: #{llama_forward.5} parent=5 // pred_fallthru
      _
  $region6: #{llama_forward.5} parent=0 // loop_footer
    %s17 = sadd.s32 1, %s13
  $region7: #{llama_forward.5} parent=0 // loop_footer_branch
    %12 = sbr.rel target = $region3
  $region8: #{llama_forward.5} parent=0 // loop_exit
    _

// kernel: llama_forward.6
$region0: #{llama_forward.6}
  #allocation0 [shape = 'u32[]', space=smem, size = 0x4, offset = 0x4, fixed_abs, tag = 'smem constant byte address 0x4 - core index']
  #allocation1 [shape = 'u32[72,128]{1,0:T(1,128)}', space=vmem, size = 0x9000, scoped, tag = 'internal scratch']
  %s0 = inlined_call_operand.vmem [shape: f32[2,8,64], index: 0, kind: input, shape index: {}]
  %s1 = inlined_call_operand.vmem [shape: f32[1,64], index: 1, kind: input, shape index: {}]
  %s2 = inlined_call_operand.vmem [shape: bf16[64,256], index: 2, kind: input, shape index: {}]
  %s3 = inlined_call_operand.vmem [shape: bf16[128,64], index: 3, kind: input, shape index: {}]
  %s4 = inlined_call_operand.vmem [shape: f32[2,8,64], index: 4, kind: output, shape index: {}]
  %s5 = sld [smem:[#allocation0]]
  $region49: #{llama_forward.6} parent=0
    _
  %s7 = ssub.s32 1, %s5
  %s8 = scalar_select 0, %s7, %s5
  loop: start=0, step=1, limit=4
  $region2: #{llama_forward.6} parent=0 // loop_pre_header
    _
  $region3: #{llama_forward.6} parent=0 // loop_header
    %s10 = sphi 0, %s14
    %p11 = scmp.ge.s32.totalorder %s10, 4
    %s20 = sphi 0, %s22
    %s23 = sphi 0, %s20
    %s24 = sphi 0, %s23
    %s40 = sphi 0, %s24
    %s44 = sphi 0, %s44
    %s46 = sphi 0, %s44
    %s47 = sphi 0, %s46
    %s61 = sphi 0, %s47
    %s65 = sphi 0, %s65
    %s67 = sphi 0, %s65
    %s68 = sphi 0, %s67
    %s82 = sphi 0, %s68
    %s86 = sphi 0, %s86
    %s88 = sphi 0, %s86
    %s89 = sphi 0, %s88
    %s103 = sphi 0, %s89
    %s109 = sphi 0, %s111
    %s112 = sphi 0, %s109
    %s113 = sphi 0, %s112
    %s129 = sphi 0, %s113
  $region4: #{llama_forward.6} parent=0 // loop_header_branch
    %13 = sbr.rel (%p11) target = $region8
  $region5: #{llama_forward.6} parent=0 // loop_body
    %s15 = ssub.s32 %s10, 1
    %s16 = ssub.s32 %s10, 2
    %s17 = sadd.s32 %s10, 1
    %s18 = ssub.s32 %s10, %s17
    %p19 = scmp.eq.s32.totalorder %s18, 0
    %s21 = sadd.s32 %s20, 1
    %s22 = scalar_select %p19, %s20, %s21
    %p25 = pneg %p19
    %p26 = scmp.eq.s32.totalorder %s10, 1
    %p27 = por %p25, %p26
    %p28 = scmp.ne.s32.totalorder %s20, %s23
    %p29 = scmp.eq.s32.totalorder %s10, 0
    %p30 = por %p28, %p29
    %p31 = scmp.ne.s32.totalorder %s20, %s23
    %p32 = scmp.eq.s32.totalorder %s15, 1
    %p33 = por %p31, %p32
    %p34 = scmp.ne.s32.totalorder %s23, %s24
    %p35 = scmp.eq.s32.totalorder %s15, 0
    %p36 = por %p34, %p35
    %p37 = scmp.ne.s32.totalorder %s23, %s24
    %p38 = scmp.eq.s32.totalorder %s16, 1
    %p39 = por %p37, %p38
    %p41 = scmp.ne.s32.totalorder %s24, %s40
    %p42 = scmp.eq.s32.totalorder %s16, 0
    %p43 = por %p41, %p42
    %s45 = sadd.s32 %s44, 1
    %p48 = scmp.eq.s32.totalorder %s10, 1
    %p49 = scmp.ne.s32.totalorder %s44, %s46
    %p50 = scmp.eq.s32.totalorder %s10, 0
    %p51 = por %p49, %p50
    %p52 = scmp.ne.s32.totalorder %s44, %s46
    %p53 = scmp.eq.s32.totalorder %s15, 1
    %p54 = por %p52, %p53
    %p55 = scmp.ne.s32.totalorder %s46, %s47
    %p56 = scmp.eq.s32.totalorder %s15, 0
    %p57 = por %p55, %p56
    %p58 = scmp.ne.s32.totalorder %s46, %s47
    %p59 = scmp.eq.s32.totalorder %s16, 1
    %p60 = por %p58, %p59
    %p62 = scmp.ne.s32.totalorder %s47, %s61
    %p63 = scmp.eq.s32.totalorder %s16, 0
    %p64 = por %p62, %p63
    %s66 = sadd.s32 %s65, 1
    %p69 = scmp.eq.s32.totalorder %s10, 1
    %p70 = scmp.ne.s32.totalorder %s65, %s67
    %p71 = scmp.eq.s32.totalorder %s10, 0
    %p72 = por %p70, %p71
    %p73 = scmp.ne.s32.totalorder %s65, %s67
    %p74 = scmp.eq.s32.totalorder %s15, 1
    %p75 = por %p73, %p74
    %p76 = scmp.ne.s32.totalorder %s67, %s68
    %p77 = scmp.eq.s32.totalorder %s15, 0
    %p78 = por %p76, %p77
    %p79 = scmp.ne.s32.totalorder %s67, %s68
    %p80 = scmp.eq.s32.totalorder %s16, 1
    %p81 = por %p79, %p80
    %p83 = scmp.ne.s32.totalorder %s68, %s82
    %p84 = scmp.eq.s32.totalorder %s16, 0
    %p85 = por %p83, %p84
    %s87 = sadd.s32 %s86, 1
    %p90 = scmp.eq.s32.totalorder %s10, 1
    %p91 = scmp.ne.s32.totalorder %s86, %s88
    %p92 = scmp.eq.s32.totalorder %s10, 0
    %p93 = por %p91, %p92
    %p94 = scmp.ne.s32.totalorder %s86, %s88
    %p95 = scmp.eq.s32.totalorder %s15, 1
    %p96 = por %p94, %p95
    %p97 = scmp.ne.s32.totalorder %s88, %s89
    %p98 = scmp.eq.s32.totalorder %s15, 0
    %p99 = por %p97, %p98
    %p100 = scmp.ne.s32.totalorder %s88, %s89
    %p101 = scmp.eq.s32.totalorder %s16, 1
    %p102 = por %p100, %p101
    %p104 = scmp.ne.s32.totalorder %s89, %s103
    %p105 = scmp.eq.s32.totalorder %s16, 0
    %p106 = por %p104, %p105
    %s107 = ssub.s32 %s10, %s17
    %p108 = scmp.eq.s32.totalorder %s107, 0
    %s110 = sadd.s32 %s109, 1
    %s111 = scalar_select %p108, %s109, %s110
    %p114 = pneg %p108
    %p115 = scmp.eq.s32.totalorder %s10, 1
    %p116 = por %p114, %p115
    %p117 = scmp.ne.s32.totalorder %s109, %s112
    %p118 = scmp.eq.s32.totalorder %s10, 0
    %p119 = por %p117, %p118
    %p120 = scmp.ne.s32.totalorder %s109, %s112
    %p121 = scmp.eq.s32.totalorder %s15, 1
    %p122 = por %p120, %p121
    %p123 = scmp.ne.s32.totalorder %s112, %s113
    %p124 = scmp.eq.s32.totalorder %s15, 0
    %p125 = por %p123, %p124
    %p126 = scmp.ne.s32.totalorder %s112, %s113
    %p127 = scmp.eq.s32.totalorder %s16, 1
    %p128 = por %p126, %p127
    %p130 = scmp.ne.s32.totalorder %s113, %s129
    %p131 = scmp.eq.s32.totalorder %s16, 0
    %p132 = por %p130, %p131
    %p133 = scmp.le.s32.totalorder 1, %s10
    %p134 = scmp.lt.s32.totalorder %s10, 3
    %p135 = pnand %p133, %p134
    %p136 = pneg %p135
    // Predicated region
    $region9: #{llama_forward.6} parent=5 // pred_check
      _
    $region10: #{llama_forward.6} parent=5 // pred_check_branch
      %138 = sbr.rel (%p135) target = $region12
    $region11: #{llama_forward.6} parent=5 // pred_region
      %s139 = ssub.s32 %s10, 1
      // Predicated region
      $region13: #{llama_forward.6} parent=11 // pred_check
        %p140 = pneg %p57
      $region14: #{llama_forward.6} parent=11 // pred_check_branch
        %142 = sbr.rel (%p140) target = $region16
      $region15: #{llama_forward.6} parent=11 // pred_region
        _
      $region16: #{llama_forward.6} parent=11 // pred_fallthru
        _
      // Predicated region
      $region17: #{llama_forward.6} parent=11 // pred_check
        %p143 = pneg %p78
      $region18: #{llama_forward.6} parent=11 // pred_check_branch
        %145 = sbr.rel (%p143) target = $region20
      $region19: #{llama_forward.6} parent=11 // pred_region
        _
      $region20: #{llama_forward.6} parent=11 // pred_fallthru
        _
      // Predicated region
      $region21: #{llama_forward.6} parent=11 // pred_check
        %p146 = pneg %p99
      $region22: #{llama_forward.6} parent=11 // pred_check_branch
        %148 = sbr.rel (%p146) target = $region24
      $region23: #{llama_forward.6} parent=11 // pred_region
        _
      $region24: #{llama_forward.6} parent=11 // pred_fallthru
        _
    $region12: #{llama_forward.6} parent=5 // pred_fallthru
      _
    %p149 = scmp.lt.s32.totalorder %s10, 2
    // Predicated region
    $region25: #{llama_forward.6} parent=5 // pred_check
      %p150 = pneg %p149
    $region26: #{llama_forward.6} parent=5 // pred_check_branch
      %152 = sbr.rel (%p150) target = $region28
    $region27: #{llama_forward.6} parent=5 // pred_region
      // Predicated region
      $region29: #{llama_forward.6} parent=27 // pred_check
        %p153 = pneg %p30
      $region30: #{llama_forward.6} parent=27 // pred_check_branch
        %155 = sbr.rel (%p153) target = $region32
      $region31: #{llama_forward.6} parent=27 // pred_region
        %p156 = scmp.lt.s32.totalorder %s10, 1
        %s157 = scalar_select %p156, %s10, 1
        %s158 = smul.addr %s157, 8
        %s159 = scalar_lea.vmem %s0, %s158
      $region32: #{llama_forward.6} parent=27 // pred_fallthru
        _
    $region28: #{llama_forward.6} parent=5 // pred_fallthru
      _
    %p160 = scmp.le.s32.totalorder 1, %s10
    %p161 = scmp.lt.s32.totalorder %s10, 3
    %p162 = pnand %p160, %p161
    %p163 = pneg %p162
    // Predicated region
    $region33: #{llama_forward.6} parent=5 // pred_check
      _
    $region34: #{llama_forward.6} parent=5 // pred_check_branch
      %165 = sbr.rel (%p162) target = $region36
    $region35: #{llama_forward.6} parent=5 // pred_region
      %s166 = ssub.s32 %s10, 1
      %p167 = scmp.lt.s32.totalorder %s15, 1
      %s168 = scalar_select %p167, %s15, 1
      %s169 = smul.addr %s168, 8
      %s170 = scalar_lea.vmem %s0, %s169
      %p171 = pneg %p36
      %p172 = pneg %p33
      %p173 = pneg %p57
      %p174 = pneg %p54
      %p175 = pneg %p78
      %p176 = pneg %p75
      %p177 = pneg %p99
      %p178 = pneg %p96
      %p179 = pneg %p125
      %p180 = pneg %p122
      %p181 = scmp.lt.s32.totalorder %s15, 1
      %s182 = scalar_select %p181, %s15, 1
      %s183 = smul.addr %s182, 8
      %s184 = scalar_lea.vmem %s4, %s183
      %p185 = scmp.lt.s32.totalorder %s15, 1
      %s186 = scalar_select %p185, %s15, 1
      %s187 = smul.addr %s186, 8
      %s188 = scalar_lea.vmem %s0, %s187
      %p189 = scmp.lt.s32.totalorder %s15, 1
      %s190 = scalar_select %p189, %s15, 1
      %s191 = smul.addr %s190, 8
      %s192 = scalar_lea.vmem %s4, %s191
      %v194 = vld [vmem:[%s188] sm:$0xff]
      %v195 = vld [vmem:[%s1] sm:$0x1]
      %v196 = vmul.f32 %v194, %v194
      %vm197 = vcmask 523264
      %v198 = vsel %vm197, %v196, 0.0
      %199 = vadd.xlane.f32.xlu0 %v198
      %v200 = vpop.xlane.xlu0 %199
      %v201 = vrcp.pop 64.0
      %v202 = vmul.f32 64.0, %v201
      %v203 = vsub.f32 1.0, %v202
      %v204 = vmul.f32 %v201, %v203
      %v205 = vadd.f32 %v201, %v204
      %vm206 = vweird.f32 %v201
      %v207 = vsel %vm206, %v201, %v205
      %v208 = vmul.f32 %v200, %v207
      %v209 = vadd.f32 %v208, 1e-05
      %v210 = vrsqrt.pop %v209
      %v211 = vmul.f32 %v210, %v209
      %v212 = vmul.f32 %v211, %v210
      %v213 = vmul.f32 0.5, %v212
      %v214 = vsub.f32 1.5, %v213
      %v215 = vmul.f32 %v210, %v214
      %vm216 = vweird.f32 %v209
      %vm217 = vweird.f32 %v210
      %vm218 = vmor %vm216, %vm217
      %v219 = vsel %vm218, %v210, %v215
      %v220 = vmul.f32 %v194, %v219
      %v222 = vperm.slane %v195, 0
      %v224 = vmul.f32 %v220, %v222
      %v225 = vpack.c.bf16 %v224, %v224
      %v226 = vld [vmem:[%s2] sm:$0xff]
      %v227 = vld [vmem:[%s2 + $0x8] sm:$0xff]
      %v228 = vld [vmem:[%s2 + $0x10] sm:$0xff]
      %v229 = vld [vmem:[%s2 + $0x18] sm:$0xff]
      %v230 = vld [vmem:[%s2 + $0x20] sm:$0xff]
      %v231 = vld [vmem:[%s2 + $0x28] sm:$0xff]
      %v232 = vld [vmem:[%s2 + $0x30] sm:$0xff]
      %v233 = vld [vmem:[%s2 + $0x38] sm:$0xff]
      %v242 = vunpack.c.l.b16 %v226
      %v243 = vunpack.c.h.b16 %v226
      %v244 = vunpack.c.l.b16 %v227
      %v245 = vunpack.c.h.b16 %v227
      %v246 = vunpack.c.l.b16 %v228
      %v247 = vunpack.c.h.b16 %v228
      %v248 = vunpack.c.l.b16 %v229
      %v249 = vunpack.c.h.b16 %v229
      %v250 = vunpack.c.l.b16 %v230
      %v251 = vunpack.c.h.b16 %v230
      %v252 = vunpack.c.l.b16 %v231
      %v253 = vunpack.c.h.b16 %v231
      %v254 = vunpack.c.l.b16 %v232
      %v255 = vunpack.c.h.b16 %v232
      %v256 = vunpack.c.l.b16 %v233
      %v257 = vunpack.c.h.b16 %v233
      %v258 = vpack.c.b16 %v244, %v242
      %v259 = vpack.c.b16 %v245, %v243
      %v260 = vpack.c.b16 %v248, %v246
      %v261 = vpack.c.b16 %v249, %v247
      %v262 = vpack.c.b16 %v252, %v250
      %v263 = vpack.c.b16 %v253, %v251
      %v264 = vpack.c.b16 %v256, %v254
      %v265 = vpack.c.b16 %v257, %v255
      %v275 = vsel %vm197, %v225, 0
      %277 = vmatpush.bf16.msra.mxu0 0
      %278 = vmatpush.bf16.msra.mxu0 0
      %279 = vmatpush.bf16.msra.mxu0 0
      %280 = vmatpush.bf16.msra.mxu0 0
      %281 = vmatpush.bf16.msra.mxu0 %v264
      %282 = vmatpush.bf16.msra.mxu0 %v262
      %283 = vmatpush.bf16.msra.mxu0 %v260
      %284 = vmatpush.bf16.msra.mxu0 %v258
      %285 = vmatmul.bf16.gmra.mxu0 %v275
      %v286 = vpop.f32.mrf.mxu0
      %v287 = vadd.f32 0.0, %v286
      %v288 = vpop.f32.mrf.mxu0
      %289 = vdwg.mxu0
      %290 = vmatpush.bf16.msra.mxu0 0
      %291 = vmatpush.bf16.msra.mxu0 0
      %292 = vmatpush.bf16.msra.mxu0 0
      %293 = vmatpush.bf16.msra.mxu0 0
      %294 = vmatpush.bf16.msra.mxu0 %v265
      %295 = vmatpush.bf16.msra.mxu0 %v263
      %296 = vmatpush.bf16.msra.mxu0 %v261
      %297 = vmatpush.bf16.msra.mxu0 %v259
      %298 = vmatmul.bf16.gmra.mxu0 %v275
      %v299 = vpop.f32.mrf.mxu0
      %v300 = vadd.f32 0.0, %v299
      %v301 = vpop.f32.mrf.mxu0
      %302 = vdwg.mxu0
      %v303 = vxor.u32 %v287, 2147483648
      %v304 = vmul.f32 %v303, 1.442695
      %v305 = vpow.pop %v304
      %v306 = vadd.f32 %v305, 1.0
      %v307 = vrcp.pop %v306
      %v308 = vmul.f32 %v306, %v307
      %v309 = vsub.f32 1.0, %v308
      %v310 = vmul.f32 %v307, %v309
      %v311 = vadd.f32 %v307, %v310
      %vm312 = vweird.f32 %v306
      %vm313 = vweird.f32 %v307
      %vm314 = vmor %vm312, %vm313
      %v315 = vsel %vm314, %v307, %v311
      %v316 = vand.u32 2147483647, %v306
      %vm317 = vcmp.eq.f32.partialorder %v316, 8.507059e+37
      %v318 = vand.u32 %v306, 2147483648
      %v319 = vor.u32 1.1754944e-38, %v318
      %v320 = vsel %vm317, %v319, %v315
      %v321 = vmul.f32 1.0, %v320
      %v322 = vmul.f32 %v287, %v321
      %v323 = vmul.f32 %v322, %v300
      %v324 = vpack.c.bf16 %v323, %v323
      %v325 = vld [vmem:[%s3] sm:$0xf]
      %v326 = vld [vmem:[%s3 + $0x4] sm:$0xf]
      %v327 = vld [vmem:[%s3 + $0x8] sm:$0xf]
      %v328 = vld [vmem:[%s3 + $0xc] sm:$0xf]
      %v329 = vld [vmem:[%s3 + $0x10] sm:$0xf]
      %v330 = vld [vmem:[%s3 + $0x14] sm:$0xf]
      %v331 = vld [vmem:[%s3 + $0x18] sm:$0xf]
      %v332 = vld [vmem:[%s3 + $0x1c] sm:$0xf]
      %v333 = vld [vmem:[%s3 + $0x20] sm:$0xf]
      %v334 = vld [vmem:[%s3 + $0x24] sm:$0xf]
      %v335 = vld [vmem:[%s3 + $0x28] sm:$0xf]
      %v336 = vld [vmem:[%s3 + $0x2c] sm:$0xf]
      %v337 = vld [vmem:[%s3 + $0x30] sm:$0xf]
      %v338 = vld [vmem:[%s3 + $0x34] sm:$0xf]
      %v339 = vld [vmem:[%s3 + $0x38] sm:$0xf]
      %v340 = vld [vmem:[%s3 + $0x3c] sm:$0xf]
      %v357 = vunpack.c.l.b16 %v325
      %v358 = vunpack.c.l.b16 %v326
      %v359 = vunpack.c.l.b16 %v327
      %v360 = vunpack.c.l.b16 %v328
      %v361 = vunpack.c.l.b16 %v329
      %v362 = vunpack.c.l.b16 %v330
      %v363 = vunpack.c.l.b16 %v331
      %v364 = vunpack.c.l.b16 %v332
      %v365 = vunpack.c.l.b16 %v333
      %v366 = vunpack.c.l.b16 %v334
      %v367 = vunpack.c.l.b16 %v335
      %v368 = vunpack.c.l.b16 %v336
      %v369 = vunpack.c.l.b16 %v337
      %v370 = vunpack.c.l.b16 %v338
      %v371 = vunpack.c.l.b16 %v339
      %v372 = vunpack.c.l.b16 %v340
      %v373 = vpack.c.b16 %v358, %v357
      %v374 = vpack.c.b16 %v360, %v359
      %v375 = vpack.c.b16 %v362, %v361
      %v376 = vpack.c.b16 %v364, %v363
      %v377 = vpack.c.b16 %v366, %v365
      %v378 = vpack.c.b16 %v368, %v367
      %v379 = vpack.c.b16 %v370, %v369
      %v380 = vpack.c.b16 %v372, %v371
      %389 = vmatpush.bf16.msra.mxu0 %v380
      %390 = vmatpush.bf16.msra.mxu0 %v379
      %391 = vmatpush.bf16.msra.mxu0 %v378
      %392 = vmatpush.bf16.msra.mxu0 %v377
      %393 = vmatpush.bf16.msra.mxu0 %v376
      %394 = vmatpush.bf16.msra.mxu0 %v375
      %395 = vmatpush.bf16.msra.mxu0 %v374
      %396 = vmatpush.bf16.msra.mxu0 %v373
      %397 = vmatmul.bf16.gmra.mxu0 %v324
      %v398 = vpop.f32.mrf.mxu0
      %v399 = vadd.f32 0.0, %v398
      %v400 = vpop.f32.mrf.mxu0
      %401 = vdwg.mxu0
      %v402 = vadd.f32 %v194, %v399
      %403 = vst.msk [vmem:[%s192] sm:$0xff] %vm197, %v402
      %p404 = scmp.lt.s32.totalorder %s15, 1
      %s405 = scalar_select %p404, %s15, 1
      %s406 = smul.addr %s405, 8
      %s407 = scalar_lea.vmem %s4, %s406
      // Predicated region
      $region37: #{llama_forward.6} parent=35 // pred_check
        %p408 = pneg %p122
      $region38: #{llama_forward.6} parent=35 // pred_check_branch
        %410 = sbr.rel (%p408) target = $region40
      $region39: #{llama_forward.6} parent=35 // pred_region
        _
      $region40: #{llama_forward.6} parent=35 // pred_fallthru
        _
    $region36: #{llama_forward.6} parent=5 // pred_fallthru
      _
    %p411 = scmp.le.s32.totalorder 2, %s10
    // Predicated region
    $region41: #{llama_forward.6} parent=5 // pred_check
      %p412 = pneg %p411
    $region42: #{llama_forward.6} parent=5 // pred_check_branch
      %414 = sbr.rel (%p412) target = $region44
    $region43: #{llama_forward.6} parent=5 // pred_region
      %s415 = ssub.s32 %s10, 2
      // Predicated region
      $region45: #{llama_forward.6} parent=43 // pred_check
        %p416 = pneg %p128
      $region46: #{llama_forward.6} parent=43 // pred_check_branch
        %418 = sbr.rel (%p416) target = $region48
      $region47: #{llama_forward.6} parent=43 // pred_region
        %p419 = scmp.lt.s32.totalorder %s16, 1
        %s420 = scalar_select %p419, %s16, 1
        %s421 = smul.addr %s420, 8
        %s422 = scalar_lea.vmem %s4, %s421
      $region48: #{llama_forward.6} parent=43 // pred_fallthru
        _
    $region44: #{llama_forward.6} parent=5 // pred_fallthru
      _
  $region6: #{llama_forward.6} parent=0 // loop_footer
    %s14 = sadd.s32 1, %s10
  $region7: #{llama_forward.6} parent=0 // loop_footer_branch
    %9 = sbr.rel target = $region3
  $region8: #{llama_forward.6} parent=0 // loop_exit
    _

</llo_original>
